<compile_context>
chip_gen: v5e
topology: v5e:2x2
jax: 0.10.0
libtpu: 0.0.40
codegen_flags: <defaults>
</compile_context>

<pallas_src>
import jax
import jax.numpy as jnp
from jax.experimental import pallas as pl
from jax.experimental.pallas import tpu as pltpu


def _flash_attn_kernel(q_ref, k_ref, v_ref, g_ref, wo_ref, o_ref,
                       m_sc, l_sc, acc_sc):
    """grid = (batch, q_tiles, kv_tiles); kv axis is the online-softmax loop."""
    j = pl.program_id(2)
    n_kv = pl.num_programs(2)

    # ---- once per (batch, q-tile): init online-softmax state -----------------
    @pl.when(j == 0)
    def _init():
        m_sc[...] = jnp.full_like(m_sc, -jnp.inf)
        l_sc[...] = jnp.zeros_like(l_sc)
        acc_sc[...] = jnp.zeros_like(acc_sc)

    q = q_ref[0]                                        # (h, tq, d[+1]) bf16, pre-scaled
    k = k_ref[0]                                        # (h, tk, d[+1]) bf16
    v = v_ref[0]                                        # (h, tk, d)     bf16

    # Scores: batched NT matmul; the padded-column mask (if any) is already
    # folded into the extra feature column of q/k -- no per-step selects.
    s = jnp.einsum("hqd,hkd->hqk", q, k,
                   preferred_element_type=jnp.float32)  # (h, tq, tk) f32

    # ---- online softmax (all f32) --------------------------------------------
    m_prev = m_sc[...]
    m_new = jnp.maximum(m_prev, jnp.max(s, axis=-1, keepdims=True))
    alpha = jnp.exp(m_prev - m_new)
    p = jnp.exp(s - m_new)
    l_sc[...] = alpha * l_sc[...] + jnp.sum(p, axis=-1, keepdims=True)
    acc_sc[...] = alpha * acc_sc[...] + jnp.einsum(
        "hqk,hkd->hqd", p.astype(jnp.bfloat16), v,
        preferred_element_type=jnp.float32)
    m_sc[...] = m_new

    # ---- finalize: (gate * 1/l) fused factor, output projection, head-sum ----
    @pl.when(j == n_kv - 1)
    def _finalize():
        inv_l = pl.reciprocal(l_sc[...], approx=True)   # (h, tq, 1)
        factor = g_ref[0] * inv_l                       # (h, tq, 1) f32
        o = (acc_sc[...] * factor).astype(jnp.bfloat16)  # (h, tq, d)
        # (h, D, d) x (h, tq, d) -> (h, D, tq): batched NT matmul, heads summed
        # with 3 cheap adds; store is lane-dense along tq.
        out_t = jnp.einsum("hDd,hqd->hDq", wo_ref[...], o,
                           preferred_element_type=jnp.float32)
        o_ref[0] = jnp.sum(out_t, axis=0).astype(o_ref.dtype)   # (D, tq)


def attention_forward(x, w_qkv, w_gate, w_out, *, heads, dim_head,
                      q_tile=256, kv_tile=1024):
    """Fused iTransformer Attention forward.

    Weights in PyTorch nn.Linear layout:
      w_qkv : (3*heads*dim_head, dim)   -- to_qkv.weight   (rows ordered qkv, h, d)
      w_gate: (heads, dim)              -- to_v_gates.weight
      w_out : (dim, heads*dim_head)     -- to_out.weight   (cols ordered h, d)
    """
    b, n, dim = x.shape
    dim_inner = heads * dim_head
    assert w_qkv.shape == (3 * dim_inner, dim)
    assert w_gate.shape == (heads, dim)
    assert w_out.shape == (dim, dim_inner)
    out_dtype = x.dtype
    scale = float(dim_head) ** -0.5

    tq = n if n <= q_tile else q_tile
    tk = n if n <= kv_tile else kv_tile
    if n > q_tile:
        assert q_tile % 128 == 0, "q_tile must be a multiple of 128 when tiling"
    if n > kv_tile:
        assert kv_tile % 8 == 0, "kv_tile must be a multiple of 8 when tiling"
    n_pad_q = pl.cdiv(n, tq) * tq
    n_pad_k = pl.cdiv(n, tk) * tk

    # ---- one lane-dense projection matmul for q, k, v and the gate logits ----
    w_all = jnp.concatenate(
        [w_qkv[:dim_inner].T * scale,            # softmax scale folded into W_q
         w_qkv[dim_inner:2 * dim_inner].T,
         w_qkv[2 * dim_inner:].T,
         w_gate.T], axis=1)                      # (dim, 3*dim_inner + heads)
    proj = x.astype(jnp.float32) @ w_all.astype(jnp.float32)   # (b, n, 3*h*d + h)

    def to_heads(a):                             # (b, n, h*d) -> (b, h, n, d)
        return a.reshape(b, n, heads, dim_head).transpose(0, 2, 1, 3)

    q = to_heads(proj[..., :dim_inner])
    k = to_heads(proj[..., dim_inner:2 * dim_inner])
    v = to_heads(proj[..., 2 * dim_inner:3 * dim_inner])
    gates = jax.nn.sigmoid(proj[..., 3 * dim_inner:])            # (b, n, h)
    gates = gates.transpose(0, 2, 1)[..., None]                  # (b, h, n, 1)

    def pad_n(a, n_pad):                          # zero-pad the token axis (axis 2)
        if n_pad == n:
            return a
        pads = [(0, 0)] * a.ndim
        pads[2] = (0, n_pad - n)
        return jnp.pad(a, pads)

    q = pad_n(q, n_pad_q)
    k = pad_n(k, n_pad_k)
    v = pad_n(v, n_pad_k)
    gates = pad_n(gates, n_pad_q)

    # Fold the padded-column score mask into the MXU: append one feature column
    # (q -> 1.0; valid k rows -> 0.0; padded k rows -> -1e30).  exp() then kills
    # padded columns without any per-step jnp.where in the kernel.
    if n_pad_k != n:
        q = jnp.concatenate([q, jnp.ones((b, heads, n_pad_q, 1), q.dtype)], axis=-1)
        kv_valid = jnp.arange(n_pad_k) < n
        bias = jnp.where(kv_valid, 0.0, -1e30).astype(k.dtype)          # (n_pad_k,)
        bias = jnp.broadcast_to(bias[None, None, :, None], (b, heads, n_pad_k, 1))
        k = jnp.concatenate([k, bias], axis=-1)
    d_aug = q.shape[-1]

    q = q.astype(jnp.bfloat16)
    k = k.astype(jnp.bfloat16)
    v = v.astype(jnp.bfloat16)
    gates = gates.astype(jnp.float32)
    # w_out cols ordered (h, d): reshape to per-head (h, dim, dim_head) slabs.
    wo = w_out.reshape(dim, heads, dim_head).transpose(1, 0, 2).astype(jnp.bfloat16)

    grid = (b, n_pad_q // tq, n_pad_k // tk)

    out = pl.pallas_call(
        _flash_attn_kernel,
        out_shape=jax.ShapeDtypeStruct((b, dim, n_pad_q), out_dtype),
        grid=grid,
        in_specs=[
            pl.BlockSpec((1, heads, tq, d_aug), lambda bb, i, j: (bb, 0, i, 0)),    # q
            pl.BlockSpec((1, heads, tk, d_aug), lambda bb, i, j: (bb, 0, j, 0)),    # k
            pl.BlockSpec((1, heads, tk, dim_head), lambda bb, i, j: (bb, 0, j, 0)),  # v
            pl.BlockSpec((1, heads, tq, 1), lambda bb, i, j: (bb, 0, i, 0)),        # gate
            pl.BlockSpec((heads, dim, dim_head), lambda bb, i, j: (0, 0, 0)),       # W_out
        ],
        # lane-dense output: (dim, tq) tiles, transposed back in the wrapper
        out_specs=pl.BlockSpec((1, dim, tq), lambda bb, i, j: (bb, 0, i)),
        scratch_shapes=[
            pltpu.VMEM((heads, tq, 1), jnp.float32),          # running max m
            pltpu.VMEM((heads, tq, 1), jnp.float32),          # running denom l
            pltpu.VMEM((heads, tq, dim_head), jnp.float32),   # running accumulator
        ],
        compiler_params=pltpu.CompilerParams(
            dimension_semantics=("parallel", "parallel", "arbitrary"),
            vmem_limit_bytes=48 * 1024 * 1024,
        ),
    )(q, k, v, gates, wo)

    return jnp.transpose(out, (0, 2, 1))[:, :n, :]


def attention_reference(x, w_qkv, w_gate, w_out, *, heads, dim_head):
    """Pure-JAX f32 reference mirroring the PyTorch module."""
    b, n, dim = x.shape
    dim_inner = heads * dim_head
    scale = dim_head ** -0.5
    qkv = x @ w_qkv.T                                           # (b, n, 3*h*d)
    qkv = qkv.reshape(b, n, 3, heads, dim_head)
    q, k, v = (jnp.transpose(qkv[:, :, i], (0, 2, 1, 3)) for i in range(3))
    s = jnp.einsum("bhnd,bhmd->bhnm", q, k) * scale
    p = jax.nn.softmax(s, axis=-1)
    out = jnp.einsum("bhnm,bhmd->bhnd", p, v)                   # (b, h, n, d)
    gates = jax.nn.sigmoid(x @ w_gate.T)                        # (b, n, h)
    out = out * jnp.transpose(gates, (0, 2, 1))[..., None]      # 'b n h -> b h n 1'
    out = jnp.transpose(out, (0, 2, 1, 3)).reshape(b, n, dim_inner)
    return out @ w_out.T


if __name__ == "__main__":
    HEADS, DIM_HEAD, DIM = 4, 32, 32
    DIM_INNER = HEADS * DIM_HEAD

    key = jax.random.PRNGKey(0)
    kx, k1, k2, k3, kx2 = jax.random.split(key, 5)

    # Weights in PyTorch nn.Linear layout.
    w_qkv = jax.random.normal(k1, (3 * DIM_INNER, DIM), dtype=jnp.float32) * 0.05
    w_gate = jax.random.normal(k2, (HEADS, DIM), dtype=jnp.float32) * 0.05
    w_out = jax.random.normal(k3, (DIM, DIM_INNER), dtype=jnp.float32) * 0.05

    # Case 1: small (b, n) -- single q/kv tile, no padding, no mask column.
    B, N = 2, 16
    x = jax.random.normal(kx, (B, N, DIM), dtype=jnp.float32)
    out = attention_forward(x, w_qkv, w_gate, w_out, heads=HEADS, dim_head=DIM_HEAD)
    out = jax.block_until_ready(out)
    ref = attention_reference(x, w_qkv, w_gate, w_out, heads=HEADS, dim_head=DIM_HEAD)
    assert out.shape == (B, N, DIM)
    assert jnp.allclose(out, ref, atol=2e-2, rtol=2e-2), "mismatch vs reference (case 1)"

    # Case 2: multiple q and kv tiles + padded tail columns (exercises the
    # online-softmax path and the fold-mask-into-matmul trick).
    N2 = 200
    x2 = jax.random.normal(kx2, (B, N2, DIM), dtype=jnp.float32)
    out2 = attention_forward(x2, w_qkv, w_gate, w_out, heads=HEADS, dim_head=DIM_HEAD,
                             q_tile=128, kv_tile=128)
    out2 = jax.block_until_ready(out2)
    ref2 = attention_reference(x2, w_qkv, w_gate, w_out, heads=HEADS, dim_head=DIM_HEAD)
    assert out2.shape == (B, N2, DIM)
    assert jnp.allclose(out2, ref2, atol=2e-2, rtol=2e-2), "mismatch vs reference (case 2)"

    print("KERNEL_OK")
</pallas_src>

<mosaic_0001>
module attributes {stable_mosaic.version = 11 : i64} {
  func.func @_flash_attn_kernel(%arg0: i32, %arg1: i32, %arg2: i32, %arg3: memref<1x4x16x32xbf16, #tpu.memory_space<vmem>>, %arg4: memref<1x4x16x32xbf16, #tpu.memory_space<vmem>>, %arg5: memref<1x4x16x32xbf16, #tpu.memory_space<vmem>>, %arg6: memref<1x4x16x1xf32, #tpu.memory_space<vmem>>, %arg7: memref<4x32x32xbf16, #tpu.memory_space<vmem>>, %arg8: memref<1x32x16xf32, #tpu.memory_space<vmem>>, %arg9: memref<4x16x1xf32, #tpu.memory_space<vmem>>, %arg10: memref<4x16x1xf32, #tpu.memory_space<vmem>>, %arg11: memref<4x16x32xf32, #tpu.memory_space<vmem>>) attributes {dimension_semantics = [#tpu.dimension_semantics<parallel>, #tpu.dimension_semantics<parallel>, #tpu.dimension_semantics<arbitrary>], iteration_bounds = array<i64: 2, 1, 1>, scalar_prefetch = 0 : i64, scratch_operands = 3 : i64, tpu.core_type = #tpu.core_type<tc>, window_params = [{transform_indices = @transform_0, window_bounds = array<i64: 1, 4, 16, 32>}, {transform_indices = @transform_1, window_bounds = array<i64: 1, 4, 16, 32>}, {transform_indices = @transform_2, window_bounds = array<i64: 1, 4, 16, 32>}, {transform_indices = @transform_3, window_bounds = array<i64: 1, 4, 16, 1>}, {pipeline_mode = #tpu.pipeline_mode<synchronous>, transform_indices = @transform_4, window_bounds = array<i64: 4, 32, 32>}, {transform_indices = @transform_5, window_bounds = array<i64: 1, 32, 16>}]} {
    %c0_i32 = arith.constant 0 : i32
    %0 = arith.cmpi eq, %arg2, %c0_i32 : i32
    %1 = arith.extui %0 : i1 to i32
    %c0_i32_0 = arith.constant 0 : i32
    %2 = arith.cmpi ne, %1, %c0_i32_0 : i32
    scf.if %2 {
      %cst_35 = arith.constant 0xFF800000 : f32
      %36 = vector.broadcast %cst_35 : f32 to vector<4x16x1xf32>
      %c0_36 = arith.constant 0 : index
      %c0_37 = arith.constant 0 : index
      %c0_38 = arith.constant 0 : index
      %37 = vector.load %arg9[%c0_36, %c0_37, %c0_38] : memref<4x16x1xf32, #tpu.memory_space<vmem>>, vector<4x16x1xf32>
      tpu.vector_store %arg9[%c0_36, %c0_37, %c0_38], %36 {strides = array<i32>} : memref<4x16x1xf32, #tpu.memory_space<vmem>>, vector<4x16x1xf32>,
      %cst_39 = arith.constant 0.000000e+00 : f32
      %38 = vector.broadcast %cst_39 : f32 to vector<4x16x1xf32>
      %c0_40 = arith.constant 0 : index
      %c0_41 = arith.constant 0 : index
      %c0_42 = arith.constant 0 : index
      %39 = vector.load %arg10[%c0_40, %c0_41, %c0_42] : memref<4x16x1xf32, #tpu.memory_space<vmem>>, vector<4x16x1xf32>
      tpu.vector_store %arg10[%c0_40, %c0_41, %c0_42], %38 {strides = array<i32>} : memref<4x16x1xf32, #tpu.memory_space<vmem>>, vector<4x16x1xf32>,
      %cst_43 = arith.constant 0.000000e+00 : f32
      %40 = vector.broadcast %cst_43 : f32 to vector<4x16x32xf32>
      %c0_44 = arith.constant 0 : index
      %c0_45 = arith.constant 0 : index
      %c0_46 = arith.constant 0 : index
      %41 = vector.load %arg11[%c0_44, %c0_45, %c0_46] : memref<4x16x32xf32, #tpu.memory_space<vmem>>, vector<4x16x32xf32>
      tpu.vector_store %arg11[%c0_44, %c0_45, %c0_46], %40 {strides = array<i32>} : memref<4x16x32xf32, #tpu.memory_space<vmem>>, vector<4x16x32xf32>,
    } else {
    }
    %c0 = arith.constant 0 : index
    %c0_1 = arith.constant 0 : index
    %c0_2 = arith.constant 0 : index
    %c0_3 = arith.constant 0 : index
    %3 = vector.load %arg3[%c0, %c0_1, %c0_2, %c0_3] : memref<1x4x16x32xbf16, #tpu.memory_space<vmem>>, vector<1x4x16x32xbf16>
    %4 = vector.shape_cast %3 : vector<1x4x16x32xbf16> to vector<4x16x32xbf16>
    %c0_4 = arith.constant 0 : index
    %c0_5 = arith.constant 0 : index
    %c0_6 = arith.constant 0 : index
    %c0_7 = arith.constant 0 : index
    %5 = vector.load %arg4[%c0_4, %c0_5, %c0_6, %c0_7] : memref<1x4x16x32xbf16, #tpu.memory_space<vmem>>, vector<1x4x16x32xbf16>
    %6 = vector.shape_cast %5 : vector<1x4x16x32xbf16> to vector<4x16x32xbf16>
    %c0_8 = arith.constant 0 : index
    %c0_9 = arith.constant 0 : index
    %c0_10 = arith.constant 0 : index
    %c0_11 = arith.constant 0 : index
    %7 = vector.load %arg5[%c0_8, %c0_9, %c0_10, %c0_11] : memref<1x4x16x32xbf16, #tpu.memory_space<vmem>>, vector<1x4x16x32xbf16>
    %8 = vector.shape_cast %7 : vector<1x4x16x32xbf16> to vector<4x16x32xbf16>
    "tpu.trace_start"() <{level = 10 : i32, message = "hqd,hkd->hqk"}> : () -> ()
    %cst = arith.constant dense<0.000000e+00> : vector<4x16x16xf32>
    %9 = tpu.matmul %4, %6, %cst {dimension_numbers = #tpu.dot_dimension_numbers<[2], [2], [1], [1], [0, 0, 0, 1, 1, 1], [0], [0]>} : vector<4x16x32xbf16>, vector<4x16x32xbf16>, vector<4x16x16xf32> -> vector<4x16x16xf32>
    "tpu.trace_stop"() : () -> ()
    %c0_12 = arith.constant 0 : index
    %c0_13 = arith.constant 0 : index
    %c0_14 = arith.constant 0 : index
    %10 = vector.load %arg9[%c0_12, %c0_13, %c0_14] : memref<4x16x1xf32, #tpu.memory_space<vmem>>, vector<4x16x1xf32>
    %cst_15 = arith.constant dense<0xFF800000> : vector<4x16xf32>
    %11 = vector.multi_reduction <maximumf>, %9, %cst_15 [2] : vector<4x16x16xf32> to vector<4x16xf32>
    %12 = vector.shape_cast %11 : vector<4x16xf32> to vector<4x16x1xf32>
    %13 = arith.maximumf %10, %12 : vector<4x16x1xf32>
    %14 = arith.subf %10, %13 : vector<4x16x1xf32>
    %15 = math.exp %14 : vector<4x16x1xf32>
    %16 = vector.broadcast %13 : vector<4x16x1xf32> to vector<4x16x16xf32>
    %17 = arith.subf %9, %16 : vector<4x16x16xf32>
    %18 = math.exp %17 : vector<4x16x16xf32>
    %c0_16 = arith.constant 0 : index
    %c0_17 = arith.constant 0 : index
    %c0_18 = arith.constant 0 : index
    %19 = vector.load %arg10[%c0_16, %c0_17, %c0_18] : memref<4x16x1xf32, #tpu.memory_space<vmem>>, vector<4x16x1xf32>
    %20 = arith.mulf %15, %19 : vector<4x16x1xf32>
    %cst_19 = arith.constant dense<0.000000e+00> : vector<4x16xf32>
    %21 = vector.multi_reduction <add>, %18, %cst_19 [2] : vector<4x16x16xf32> to vector<4x16xf32>
    %22 = vector.shape_cast %21 : vector<4x16xf32> to vector<4x16x1xf32>
    %23 = arith.addf %20, %22 : vector<4x16x1xf32>
    %c0_20 = arith.constant 0 : index
    %c0_21 = arith.constant 0 : index
    %c0_22 = arith.constant 0 : index
    %24 = vector.load %arg10[%c0_20, %c0_21, %c0_22] : memref<4x16x1xf32, #tpu.memory_space<vmem>>, vector<4x16x1xf32>
    tpu.vector_store %arg10[%c0_20, %c0_21, %c0_22], %23 {strides = array<i32>} : memref<4x16x1xf32, #tpu.memory_space<vmem>>, vector<4x16x1xf32>,
    %c0_23 = arith.constant 0 : index
    %c0_24 = arith.constant 0 : index
    %c0_25 = arith.constant 0 : index
    %25 = vector.load %arg11[%c0_23, %c0_24, %c0_25] : memref<4x16x32xf32, #tpu.memory_space<vmem>>, vector<4x16x32xf32>
    %26 = vector.broadcast %15 : vector<4x16x1xf32> to vector<4x16x32xf32>
    %27 = arith.mulf %26, %25 : vector<4x16x32xf32>
    %28 = arith.truncf %18 : vector<4x16x16xf32> to vector<4x16x16xbf16>
    "tpu.trace_start"() <{level = 10 : i32, message = "hqk,hkd->hqd"}> : () -> ()
    %cst_26 = arith.constant dense<0.000000e+00> : vector<4x16x32xf32>
    %29 = tpu.matmul %28, %8, %cst_26 {dimension_numbers = #tpu.dot_dimension_numbers<[2], [1], [1], [2], [0, 0, 0, 1, 1, 2], [0], [0]>} : vector<4x16x16xbf16>, vector<4x16x32xbf16>, vector<4x16x32xf32> -> vector<4x16x32xf32>
    "tpu.trace_stop"() : () -> ()
    %30 = arith.addf %27, %29 : vector<4x16x32xf32>
    %c0_27 = arith.constant 0 : index
    %c0_28 = arith.constant 0 : index
    %c0_29 = arith.constant 0 : index
    %31 = vector.load %arg11[%c0_27, %c0_28, %c0_29] : memref<4x16x32xf32, #tpu.memory_space<vmem>>, vector<4x16x32xf32>
    tpu.vector_store %arg11[%c0_27, %c0_28, %c0_29], %30 {strides = array<i32>} : memref<4x16x32xf32, #tpu.memory_space<vmem>>, vector<4x16x32xf32>,
    %c0_30 = arith.constant 0 : index
    %c0_31 = arith.constant 0 : index
    %c0_32 = arith.constant 0 : index
    %32 = vector.load %arg9[%c0_30, %c0_31, %c0_32] : memref<4x16x1xf32, #tpu.memory_space<vmem>>, vector<4x16x1xf32>
    tpu.vector_store %arg9[%c0_30, %c0_31, %c0_32], %13 {strides = array<i32>} : memref<4x16x1xf32, #tpu.memory_space<vmem>>, vector<4x16x1xf32>,
    %c0_i32_33 = arith.constant 0 : i32
    %33 = arith.cmpi eq, %arg2, %c0_i32_33 : i32
    %34 = arith.extui %33 : i1 to i32
    %c0_i32_34 = arith.constant 0 : i32
    %35 = arith.cmpi ne, %34, %c0_i32_34 : i32
    scf.if %35 {
      %c0_35 = arith.constant 0 : index
      %c0_36 = arith.constant 0 : index
      %c0_37 = arith.constant 0 : index
      %36 = vector.load %arg10[%c0_35, %c0_36, %c0_37] : memref<4x16x1xf32, #tpu.memory_space<vmem>>, vector<4x16x1xf32>
      %37 = tpu.reciprocal %36 {approx = true} : vector<4x16x1xf32> -> vector<4x16x1xf32>
      %c0_38 = arith.constant 0 : index
      %c0_39 = arith.constant 0 : index
      %c0_40 = arith.constant 0 : index
      %c0_41 = arith.constant 0 : index
      %38 = vector.load %arg6[%c0_38, %c0_39, %c0_40, %c0_41] : memref<1x4x16x1xf32, #tpu.memory_space<vmem>>, vector<1x4x16x1xf32>
      %39 = vector.shape_cast %38 : vector<1x4x16x1xf32> to vector<4x16x1xf32>
      %40 = arith.mulf %39, %37 : vector<4x16x1xf32>
      %c0_42 = arith.constant 0 : index
      %c0_43 = arith.constant 0 : index
      %c0_44 = arith.constant 0 : index
      %41 = vector.load %arg11[%c0_42, %c0_43, %c0_44] : memref<4x16x32xf32, #tpu.memory_space<vmem>>, vector<4x16x32xf32>
      %42 = vector.broadcast %40 : vector<4x16x1xf32> to vector<4x16x32xf32>
      %43 = arith.mulf %41, %42 : vector<4x16x32xf32>
      %44 = arith.truncf %43 : vector<4x16x32xf32> to vector<4x16x32xbf16>
      %c0_45 = arith.constant 0 : index
      %c0_46 = arith.constant 0 : index
      %c0_47 = arith.constant 0 : index
      %45 = vector.load %arg7[%c0_45, %c0_46, %c0_47] : memref<4x32x32xbf16, #tpu.memory_space<vmem>>, vector<4x32x32xbf16>
      "tpu.trace_start"() <{level = 10 : i32, message = "hDd,hqd->hDq"}> : () -> ()
      %cst_48 = arith.constant dense<0.000000e+00> : vector<4x32x16xf32>
      %46 = tpu.matmul %45, %44, %cst_48 {dimension_numbers = #tpu.dot_dimension_numbers<[2], [2], [1], [1], [0, 0, 0, 1, 1, 1], [0], [0]>} : vector<4x32x32xbf16>, vector<4x16x32xbf16>, vector<4x32x16xf32> -> vector<4x32x16xf32>
      "tpu.trace_stop"() : () -> ()
      %cst_49 = arith.constant dense<0.000000e+00> : vector<32x16xf32>
      %47 = vector.multi_reduction <add>, %46, %cst_49 [0] : vector<4x32x16xf32> to vector<32x16xf32>
      %c0_50 = arith.constant 0 : index
      %c0_51 = arith.constant 0 : index
      %c0_52 = arith.constant 0 : index
      %48 = vector.load %arg8[%c0_50, %c0_51, %c0_52] : memref<1x32x16xf32, #tpu.memory_space<vmem>>, vector<1x32x16xf32>
      %49 = vector.shape_cast %48 : vector<1x32x16xf32> to vector<32x16xf32>
      %50 = vector.shape_cast %47 : vector<32x16xf32> to vector<1x32x16xf32>
      tpu.vector_store %arg8[%c0_50, %c0_51, %c0_52], %50 {strides = array<i32>} : memref<1x32x16xf32, #tpu.memory_space<vmem>>, vector<1x32x16xf32>,
    } else {
    }
    return
  }
  func.func @transform_0(%arg0: i32, %arg1: i32, %arg2: i32) -> (i32, i32, i32, i32) {
    %c0_i32 = arith.constant 0 : i32
    %c0_i32_0 = arith.constant 0 : i32
    %c0_i32_1 = arith.constant 0 : i32
    return %arg0, %c0_i32, %arg1, %c0_i32_0 : i32, i32, i32, i32
  }
  func.func @transform_1(%arg0: i32, %arg1: i32, %arg2: i32) -> (i32, i32, i32, i32) {
    %c0_i32 = arith.constant 0 : i32
    %c0_i32_0 = arith.constant 0 : i32
    %c0_i32_1 = arith.constant 0 : i32
    return %arg0, %c0_i32, %arg2, %c0_i32_0 : i32, i32, i32, i32
  }
  func.func @transform_2(%arg0: i32, %arg1: i32, %arg2: i32) -> (i32, i32, i32, i32) {
    %c0_i32 = arith.constant 0 : i32
    %c0_i32_0 = arith.constant 0 : i32
    %c0_i32_1 = arith.constant 0 : i32
    return %arg0, %c0_i32, %arg2, %c0_i32_0 : i32, i32, i32, i32
  }
  func.func @transform_3(%arg0: i32, %arg1: i32, %arg2: i32) -> (i32, i32, i32, i32) {
    %c0_i32 = arith.constant 0 : i32
    %c0_i32_0 = arith.constant 0 : i32
    %c0_i32_1 = arith.constant 0 : i32
    return %arg0, %c0_i32, %arg1, %c0_i32_0 : i32, i32, i32, i32
  }
  func.func @transform_4(%arg0: i32, %arg1: i32, %arg2: i32) -> (i32, i32, i32) {
    %c0_i32 = arith.constant 0 : i32
    %c0_i32_0 = arith.constant 0 : i32
    %c0_i32_1 = arith.constant 0 : i32
    %c0_i32_2 = arith.constant 0 : i32
    return %c0_i32, %c0_i32_0, %c0_i32_1 : i32, i32, i32
  }
  func.func @transform_5(%arg0: i32, %arg1: i32, %arg2: i32) -> (i32, i32, i32) {
    %c0_i32 = arith.constant 0 : i32
    %c0_i32_0 = arith.constant 0 : i32
    return %arg0, %c0_i32, %arg1 : i32, i32, i32
  }
}

</mosaic_0001>

<llo_original>
// kernel: tpu_custom_call.1
$region0: #{tpu_custom_call.1}
  #allocation0 [shape = 'u32[]', space=smem, size = 0x4, offset = 0x4, fixed_abs, tag = 'smem constant byte address 0x4 - core index']
  #allocation1 [shape = 'u32[72,128]{1,0:T(1,128)}', space=vmem, size = 0x9000, scoped, tag = 'internal scratch']
  #allocation2 [shape = 'f32[4,16,1]{2,1,0:T(8,128)}', space=vmem, size = 0x8000, scoped, tag = 'scratch operand']
  #allocation3 [shape = 'f32[4,16,1]{2,1,0:T(8,128)}', space=vmem, size = 0x8000, scoped, tag = 'scratch operand']
  #allocation4 [shape = 'f32[4,16,32]{2,1,0:T(8,128)}', space=vmem, size = 0x8000, scoped, tag = 'scratch operand']
  %s0 = inlined_call_operand.vmem [shape: bf16[2,4,16,32], index: 0, kind: input, shape index: {}]
  %s1 = inlined_call_operand.vmem [shape: bf16[2,4,16,32], index: 1, kind: input, shape index: {}]
  %s2 = inlined_call_operand.hbm [shape: bf16[2,4,16,32], index: 2, kind: input, shape index: {}]
  %s3 = inlined_call_operand.vmem [shape: f32[2,4,16,1], index: 3, kind: input, shape index: {}]
  %s4 = inlined_call_operand.hbm [shape: bf16[4,32,32], index: 4, kind: input, shape index: {}]
  %s5 = inlined_call_operand.vmem [shape: f32[2,32,16], index: 5, kind: output, shape index: {}]
  %s6 = sld [smem:[#allocation0]]
  $region69: #{tpu_custom_call.1} parent=0
    _
  %s8 = ssub.s32 1, %s6
  %s9 = scalar_select 0, %s8, %s6
  $region1: #{tpu_custom_call.1} parent=0
    #allocation5 [shape = 'u8[32768]{0}', space=vmem, size = 0x8000, scoped, tag = 'input window, operand 2']
    #allocation6 [shape = 's32[2]{0}', space=sflag, size = 0x8, scoped, tag = 'scoped memory for tpu_custom_call.1']
    #allocation7 [shape = 'u8[32768]{0}', space=vmem, size = 0x8000, scoped, tag = 'input window, operand 4, single buffered']
    #allocation8 [shape = 's32[1]{0}', space=sflag, size = 0x4, scoped, tag = 'scoped memory for tpu_custom_call.1']
    %10 = vsyncpa [#allocation6], 0
    %s11 = scalar_lea.sflag [#allocation6], 1
    %12 = vsyncpa %s11, 0
    %13 = vsyncpa [#allocation8], 0
    loop: start=0, step=1, limit=4
    $region2: #{tpu_custom_call.1} parent=1 // loop_pre_header
      _
    $region3: #{tpu_custom_call.1} parent=1 // loop_header
      %s15 = sphi 0, %s19
      %p16 = scmp.ge.s32.totalorder %s15, 4
      %s22 = sphi 0, %s41
      %s23 = sphi 0, %s37
      %s24 = sphi 0, %s33
      %s25 = sphi 0, %s22
      %s26 = sphi 0, %s23
      %s27 = sphi 0, %s24
      %s28 = sphi 0, %s25
      %s29 = sphi 0, %s26
      %s30 = sphi 0, %s27
      %s46 = sphi 0, %s48
      %s49 = sphi 0, %s46
      %s50 = sphi 0, %s49
      %s66 = sphi 0, %s50
      %s74 = sphi 0, %s76
      %s77 = sphi 0, %s74
      %s78 = sphi 0, %s77
      %s94 = sphi 0, %s78
      %s102 = sphi 0, %s104
      %s105 = sphi 0, %s102
      %s106 = sphi 0, %s105
      %s122 = sphi 0, %s106
      %s130 = sphi 0, %s132
      %s133 = sphi 0, %s130
      %s134 = sphi 0, %s133
      %s150 = sphi 0, %s134
      %s154 = sphi 0, %s154
      %s156 = sphi 0, %s154
      %s157 = sphi 0, %s156
      %s171 = sphi 0, %s157
      %s179 = sphi 0, %s181
      %s182 = sphi 0, %s179
      %s183 = sphi 0, %s182
      %s199 = sphi 0, %s183
    $region4: #{tpu_custom_call.1} parent=1 // loop_header_branch
      %18 = sbr.rel (%p16) target = $region8
    $region5: #{tpu_custom_call.1} parent=1 // loop_body
      %s20 = ssub.s32 %s15, 1
      %s21 = ssub.s32 %s15, 2
      %s31 = sadd.s32 1, %s24
      %p32 = scmp.ge.s32.totalorder %s31, 1
      %s33 = scalar_select %p32, 0, %s31
      %s34 = sadd.s32 1, %s23
      %s35 = scalar_select %p32, %s34, %s23
      %p36 = scmp.ge.s32.totalorder %s35, 1
      %s37 = scalar_select %p36, 0, %s35
      %s38 = sadd.s32 1, %s22
      %s39 = scalar_select %p36, %s38, %s22
      %p40 = scmp.ge.s32.totalorder %s39, 2
      %s41 = scalar_select %p40, 0, %s39
      %s42 = ssub.s32 %s22, %s41
      %s43 = ssub.s32 %s23, %s37
      %s44 = sor.u32 %s42, %s43
      %p45 = scmp.eq.s32.totalorder %s44, 0
      %s47 = sadd.s32 %s46, 1
      %s48 = scalar_select %p45, %s46, %s47
      %p51 = pneg %p45
      %p52 = scmp.eq.s32.totalorder %s15, 1
      %p53 = por %p51, %p52
      %p54 = scmp.ne.s32.totalorder %s46, %s49
      %p55 = scmp.eq.s32.totalorder %s15, 0
      %p56 = por %p54, %p55
      %p57 = scmp.ne.s32.totalorder %s46, %s49
      %p58 = scmp.eq.s32.totalorder %s20, 1
      %p59 = por %p57, %p58
      %p60 = scmp.ne.s32.totalorder %s49, %s50
      %p61 = scmp.eq.s32.totalorder %s20, 0
      %p62 = por %p60, %p61
      %p63 = scmp.ne.s32.totalorder %s49, %s50
      %p64 = scmp.eq.s32.totalorder %s21, 1
      %p65 = por %p63, %p64
      %p67 = scmp.ne.s32.totalorder %s50, %s66
      %p68 = scmp.eq.s32.totalorder %s21, 0
      %p69 = por %p67, %p68
      %s70 = ssub.s32 %s22, %s41
      %s71 = ssub.s32 %s24, %s33
      %s72 = sor.u32 %s70, %s71
      %p73 = scmp.eq.s32.totalorder %s72, 0
      %s75 = sadd.s32 %s74, 1
      %s76 = scalar_select %p73, %s74, %s75
      %p79 = pneg %p73
      %p80 = scmp.eq.s32.totalorder %s15, 1
      %p81 = por %p79, %p80
      %p82 = scmp.ne.s32.totalorder %s74, %s77
      %p83 = scmp.eq.s32.totalorder %s15, 0
      %p84 = por %p82, %p83
      %p85 = scmp.ne.s32.totalorder %s74, %s77
      %p86 = scmp.eq.s32.totalorder %s20, 1
      %p87 = por %p85, %p86
      %p88 = scmp.ne.s32.totalorder %s77, %s78
      %p89 = scmp.eq.s32.totalorder %s20, 0
      %p90 = por %p88, %p89
      %p91 = scmp.ne.s32.totalorder %s77, %s78
      %p92 = scmp.eq.s32.totalorder %s21, 1
      %p93 = por %p91, %p92
      %p95 = scmp.ne.s32.totalorder %s78, %s94
      %p96 = scmp.eq.s32.totalorder %s21, 0
      %p97 = por %p95, %p96
      %s98 = ssub.s32 %s22, %s41
      %s99 = ssub.s32 %s24, %s33
      %s100 = sor.u32 %s98, %s99
      %p101 = scmp.eq.s32.totalorder %s100, 0
      %s103 = sadd.s32 %s102, 1
      %s104 = scalar_select %p101, %s102, %s103
      %p107 = pneg %p101
      %p108 = scmp.eq.s32.totalorder %s15, 1
      %p109 = por %p107, %p108
      %p110 = scmp.ne.s32.totalorder %s102, %s105
      %p111 = scmp.eq.s32.totalorder %s15, 0
      %p112 = por %p110, %p111
      %p113 = scmp.ne.s32.totalorder %s102, %s105
      %p114 = scmp.eq.s32.totalorder %s20, 1
      %p115 = por %p113, %p114
      %p116 = scmp.ne.s32.totalorder %s105, %s106
      %p117 = scmp.eq.s32.totalorder %s20, 0
      %p118 = por %p116, %p117
      %p119 = scmp.ne.s32.totalorder %s105, %s106
      %p120 = scmp.eq.s32.totalorder %s21, 1
      %p121 = por %p119, %p120
      %p123 = scmp.ne.s32.totalorder %s106, %s122
      %p124 = scmp.eq.s32.totalorder %s21, 0
      %p125 = por %p123, %p124
      %s126 = ssub.s32 %s22, %s41
      %s127 = ssub.s32 %s23, %s37
      %s128 = sor.u32 %s126, %s127
      %p129 = scmp.eq.s32.totalorder %s128, 0
      %s131 = sadd.s32 %s130, 1
      %s132 = scalar_select %p129, %s130, %s131
      %p135 = pneg %p129
      %p136 = scmp.eq.s32.totalorder %s15, 1
      %p137 = por %p135, %p136
      %p138 = scmp.ne.s32.totalorder %s130, %s133
      %p139 = scmp.eq.s32.totalorder %s15, 0
      %p140 = por %p138, %p139
      %p141 = scmp.ne.s32.totalorder %s130, %s133
      %p142 = scmp.eq.s32.totalorder %s20, 1
      %p143 = por %p141, %p142
      %p144 = scmp.ne.s32.totalorder %s133, %s134
      %p145 = scmp.eq.s32.totalorder %s20, 0
      %p146 = por %p144, %p145
      %p147 = scmp.ne.s32.totalorder %s133, %s134
      %p148 = scmp.eq.s32.totalorder %s21, 1
      %p149 = por %p147, %p148
      %p151 = scmp.ne.s32.totalorder %s134, %s150
      %p152 = scmp.eq.s32.totalorder %s21, 0
      %p153 = por %p151, %p152
      %s155 = sadd.s32 %s154, 1
      %p158 = scmp.eq.s32.totalorder %s15, 1
      %p159 = scmp.ne.s32.totalorder %s154, %s156
      %p160 = scmp.eq.s32.totalorder %s15, 0
      %p161 = por %p159, %p160
      %p162 = scmp.ne.s32.totalorder %s154, %s156
      %p163 = scmp.eq.s32.totalorder %s20, 1
      %p164 = por %p162, %p163
      %p165 = scmp.ne.s32.totalorder %s156, %s157
      %p166 = scmp.eq.s32.totalorder %s20, 0
      %p167 = por %p165, %p166
      %p168 = scmp.ne.s32.totalorder %s156, %s157
      %p169 = scmp.eq.s32.totalorder %s21, 1
      %p170 = por %p168, %p169
      %p172 = scmp.ne.s32.totalorder %s157, %s171
      %p173 = scmp.eq.s32.totalorder %s21, 0
      %p174 = por %p172, %p173
      %s175 = ssub.s32 %s22, %s41
      %s176 = ssub.s32 %s23, %s37
      %s177 = sor.u32 %s175, %s176
      %p178 = scmp.eq.s32.totalorder %s177, 0
      %s180 = sadd.s32 %s179, 1
      %s181 = scalar_select %p178, %s179, %s180
      %p184 = pneg %p178
      %p185 = scmp.eq.s32.totalorder %s15, 1
      %p186 = por %p184, %p185
      %p187 = scmp.ne.s32.totalorder %s179, %s182
      %p188 = scmp.eq.s32.totalorder %s15, 0
      %p189 = por %p187, %p188
      %p190 = scmp.ne.s32.totalorder %s179, %s182
      %p191 = scmp.eq.s32.totalorder %s20, 1
      %p192 = por %p190, %p191
      %p193 = scmp.ne.s32.totalorder %s182, %s183
      %p194 = scmp.eq.s32.totalorder %s20, 0
      %p195 = por %p193, %p194
      %p196 = scmp.ne.s32.totalorder %s182, %s183
      %p197 = scmp.eq.s32.totalorder %s21, 1
      %p198 = por %p196, %p197
      %p200 = scmp.ne.s32.totalorder %s183, %s199
      %p201 = scmp.eq.s32.totalorder %s21, 0
      %p202 = por %p200, %p201
      %p203 = scmp.le.s32.totalorder 1, %s15
      %p204 = scmp.lt.s32.totalorder %s15, 3
      %p205 = pnand %p203, %p204
      %p206 = pneg %p205
      // Predicated region
      $region9: #{tpu_custom_call.1} parent=5 // pred_check
        _
      $region10: #{tpu_custom_call.1} parent=5 // pred_check_branch
        %208 = sbr.rel (%p205) target = $region12
      $region11: #{tpu_custom_call.1} parent=5 // pred_region
        %s209 = ssub.s32 %s15, 1
        // Predicated region
        $region13: #{tpu_custom_call.1} parent=11 // pred_check
          %p210 = pneg %p167
        $region14: #{tpu_custom_call.1} parent=11 // pred_check_branch
          %212 = sbr.rel (%p210) target = $region16
        $region15: #{tpu_custom_call.1} parent=11 // pred_region
          %214 = vsyncadd [#allocation8], 0
          %s215 = sshll.u32 %s4, 4
          %s216 = int_to_ptr.hbm [resolvable:$true] %s215
          %s217 = sshll.u32 [#allocation7], 4
          %s218 = int_to_ptr.vmem [resolvable:$true] %s217
          %223 = dma.hbm_to_vmem [thread:$0]  %s216, 1024, %s218, [#allocation8], 64, 64, 4
        $region16: #{tpu_custom_call.1} parent=11 // pred_fallthru
          _
      $region12: #{tpu_custom_call.1} parent=5 // pred_fallthru
        _
      %p224 = scmp.lt.s32.totalorder %s15, 2
      // Predicated region
      $region17: #{tpu_custom_call.1} parent=5 // pred_check
        %p225 = pneg %p224
      $region18: #{tpu_custom_call.1} parent=5 // pred_check_branch
        %227 = sbr.rel (%p225) target = $region20
      $region19: #{tpu_custom_call.1} parent=5 // pred_region
        // Predicated region
        $region21: #{tpu_custom_call.1} parent=19 // pred_check
          %p228 = pneg %p56
        $region22: #{tpu_custom_call.1} parent=19 // pred_check_branch
          %230 = sbr.rel (%p228) target = $region24
        $region23: #{tpu_custom_call.1} parent=19 // pred_region
          %s231 = smul.u32 2, %s23
          %p232 = scmp.lt.s32.totalorder %s22, 1
          %s233 = scalar_select %p232, %s22, 1
          %p234 = scmp.lt.s32.totalorder %s231, 1
          %s235 = scalar_select %p234, %s231, 1
          %s236 = smul.addr %s233, 8
          %s237 = sadd.s32 %s235, %s236
          %s238 = smul.addr %s237, 4
          %s239 = scalar_lea.vmem %s0, %s238
          %s240 = smul.u32 2, %s23
        $region24: #{tpu_custom_call.1} parent=19 // pred_fallthru
          _
        // Predicated region
        $region25: #{tpu_custom_call.1} parent=19 // pred_check
          %p241 = pneg %p84
        $region26: #{tpu_custom_call.1} parent=19 // pred_check_branch
          %243 = sbr.rel (%p241) target = $region28
        $region27: #{tpu_custom_call.1} parent=19 // pred_region
          %s244 = smul.u32 2, %s24
          %p245 = scmp.lt.s32.totalorder %s22, 1
          %s246 = scalar_select %p245, %s22, 1
          %p247 = scmp.lt.s32.totalorder %s244, 1
          %s248 = scalar_select %p247, %s244, 1
          %s249 = smul.addr %s246, 8
          %s250 = sadd.s32 %s248, %s249
          %s251 = smul.addr %s250, 4
          %s252 = scalar_lea.vmem %s1, %s251
          %s253 = smul.u32 2, %s24
        $region28: #{tpu_custom_call.1} parent=19 // pred_fallthru
          _
        // Predicated region
        $region29: #{tpu_custom_call.1} parent=19 // pred_check
          %p254 = pneg %p112
        $region30: #{tpu_custom_call.1} parent=19 // pred_check_branch
          %256 = sbr.rel (%p254) target = $region32
        $region31: #{tpu_custom_call.1} parent=19 // pred_region
          %s257 = sand.u32 %s102, 1
          %s258 = scalar_lea.sflag [#allocation6], %s257
          %s259 = sand.u32 %s102, 1
          %s260 = smul.addr %s259, 32
          %s261 = scalar_lea.vmem [#allocation5], %s260
          %s262 = smul.u32 2, %s24
          %264 = vsyncadd %s258, 0
          %s265 = smul.addr %s22, 8
          %s266 = sadd.s32 %s262, %s265
          %s267 = smul.addr %s266, 4
          %s268 = scalar_lea.hbm %s2, %s267
          %s269 = sshll.u32 %s268, 4
          %s270 = int_to_ptr.hbm [resolvable:$true] %s269
          %s271 = sshll.u32 %s261, 4
          %s272 = int_to_ptr.vmem [resolvable:$true] %s271
          %277 = dma.hbm_to_vmem [thread:$0]  %s270, 512, %s272, %s258, 64, 64, 4
        $region32: #{tpu_custom_call.1} parent=19 // pred_fallthru
          _
        // Predicated region
        $region33: #{tpu_custom_call.1} parent=19 // pred_check
          %p278 = pneg %p140
        $region34: #{tpu_custom_call.1} parent=19 // pred_check_branch
          %280 = sbr.rel (%p278) target = $region36
        $region35: #{tpu_custom_call.1} parent=19 // pred_region
          %s281 = smul.u32 2, %s23
          %p282 = scmp.lt.s32.totalorder %s22, 1
          %s283 = scalar_select %p282, %s22, 1
          %p284 = scmp.lt.s32.totalorder %s281, 1
          %s285 = scalar_select %p284, %s281, 1
          %s286 = smul.addr %s283, 8
          %s287 = sadd.s32 %s285, %s286
          %s288 = smul.addr %s287, 8
          %s289 = scalar_lea.vmem %s3, %s288
          %s290 = smul.u32 2, %s23
        $region36: #{tpu_custom_call.1} parent=19 // pred_fallthru
          _
      $region20: #{tpu_custom_call.1} parent=5 // pred_fallthru
        _
      %p291 = scmp.le.s32.totalorder 1, %s15
      %p292 = scmp.lt.s32.totalorder %s15, 3
      %p293 = pnand %p291, %p292
      %p294 = pneg %p293
      // Predicated region
      $region37: #{tpu_custom_call.1} parent=5 // pred_check
        _
      $region38: #{tpu_custom_call.1} parent=5 // pred_check_branch
        %296 = sbr.rel (%p293) target = $region40
      $region39: #{tpu_custom_call.1} parent=5 // pred_region
        %s297 = ssub.s32 %s15, 1
        %s298 = sand.u32 %s105, 1
        %s299 = scalar_lea.sflag [#allocation6], %s298
        %s300 = sand.u32 %s105, 1
        %s301 = smul.addr %s300, 32
        %s302 = scalar_lea.vmem [#allocation5], %s301
        // Predicated region
        $region41: #{tpu_custom_call.1} parent=39 // pred_check
          %p303 = pneg %p118
        $region42: #{tpu_custom_call.1} parent=39 // pred_check_branch
          %305 = sbr.rel (%p303) target = $region44
        $region43: #{tpu_custom_call.1} parent=39 // pred_region
          %307 = dma.done %s299, 512
        $region44: #{tpu_custom_call.1} parent=39 // pred_fallthru
          _
        // Predicated region
        $region45: #{tpu_custom_call.1} parent=39 // pred_check
          %p308 = pneg %p167
        $region46: #{tpu_custom_call.1} parent=39 // pred_check_branch
          %310 = sbr.rel (%p308) target = $region48
        $region47: #{tpu_custom_call.1} parent=39 // pred_region
          %312 = dma.done [#allocation8], 1024
        $region48: #{tpu_custom_call.1} parent=39 // pred_fallthru
          _
        %s313 = smul.u32 2, %s26
        %p314 = scmp.lt.s32.totalorder %s25, 1
        %s315 = scalar_select %p314, %s25, 1
        %p316 = scmp.lt.s32.totalorder %s313, 1
        %s317 = scalar_select %p316, %s313, 1
        %s318 = smul.addr %s315, 8
        %s319 = sadd.s32 %s317, %s318
        %s320 = smul.addr %s319, 4
        %s321 = scalar_lea.vmem %s0, %s320
        %p322 = pneg %p62
        %p323 = pneg %p59
        %s324 = smul.u32 2, %s27
        %p325 = scmp.lt.s32.totalorder %s25, 1
        %s326 = scalar_select %p325, %s25, 1
        %p327 = scmp.lt.s32.totalorder %s324, 1
        %s328 = scalar_select %p327, %s324, 1
        %s329 = smul.addr %s326, 8
        %s330 = sadd.s32 %s328, %s329
        %s331 = smul.addr %s330, 4
        %s332 = scalar_lea.vmem %s1, %s331
        %p333 = pneg %p90
        %p334 = pneg %p87
        %s335 = sand.u32 %s105, 1
        %s336 = scalar_lea.sflag [#allocation6], %s335
        %s337 = sand.u32 %s105, 1
        %s338 = smul.addr %s337, 32
        %s339 = scalar_lea.vmem [#allocation5], %s338
        %p340 = pneg %p118
        %p341 = pneg %p115
        %s342 = smul.u32 2, %s26
        %p343 = scmp.lt.s32.totalorder %s25, 1
        %s344 = scalar_select %p343, %s25, 1
        %p345 = scmp.lt.s32.totalorder %s342, 1
        %s346 = scalar_select %p345, %s342, 1
        %s347 = smul.addr %s344, 8
        %s348 = sadd.s32 %s346, %s347
        %s349 = smul.addr %s348, 8
        %s350 = scalar_lea.vmem %s3, %s349
        %p351 = pneg %p146
        %p352 = pneg %p143
        %p353 = pneg %p167
        %p354 = pneg %p164
        %p355 = pneg %p195
        %p356 = pneg %p192
        %p357 = scmp.lt.s32.totalorder %s25, 1
        %s358 = scalar_select %p357, %s25, 1
        %p359 = scmp.lt.s32.totalorder %s26, 0
        %s360 = scalar_select %p359, %s26, 0
        %s361 = smul.addr %s358, 4
        %s362 = sadd.s32 %s360, %s361
        %s363 = smul.addr %s362, 8
        %s364 = scalar_lea.vmem %s5, %s363
        %s365 = smul.u32 2, %s26
        %p366 = scmp.lt.s32.totalorder %s25, 1
        %s367 = scalar_select %p366, %s25, 1
        %p368 = scmp.lt.s32.totalorder %s365, 1
        %s369 = scalar_select %p368, %s365, 1
        %s370 = smul.addr %s367, 8
        %s371 = sadd.s32 %s369, %s370
        %s372 = smul.addr %s371, 4
        %s373 = scalar_lea.vmem %s0, %s372
        %s374 = smul.u32 2, %s26
        %s375 = smul.u32 2, %s27
        %p376 = scmp.lt.s32.totalorder %s25, 1
        %s377 = scalar_select %p376, %s25, 1
        %p378 = scmp.lt.s32.totalorder %s375, 1
        %s379 = scalar_select %p378, %s375, 1
        %s380 = smul.addr %s377, 8
        %s381 = sadd.s32 %s379, %s380
        %s382 = smul.addr %s381, 4
        %s383 = scalar_lea.vmem %s1, %s382
        %s384 = smul.u32 2, %s27
        %s385 = smul.u32 2, %s27
        %s386 = smul.u32 2, %s26
        %p387 = scmp.lt.s32.totalorder %s25, 1
        %s388 = scalar_select %p387, %s25, 1
        %p389 = scmp.lt.s32.totalorder %s386, 1
        %s390 = scalar_select %p389, %s386, 1
        %s391 = smul.addr %s388, 8
        %s392 = sadd.s32 %s390, %s391
        %s393 = smul.addr %s392, 8
        %s394 = scalar_lea.vmem %s3, %s393
        %s395 = smul.u32 2, %s26
        %p396 = scmp.lt.s32.totalorder %s25, 1
        %s397 = scalar_select %p396, %s25, 1
        %p398 = scmp.lt.s32.totalorder %s26, 0
        %s399 = scalar_select %p398, %s26, 0
        %s400 = smul.addr %s397, 4
        %s401 = sadd.s32 %s399, %s400
        %s402 = smul.addr %s401, 8
        %s403 = scalar_lea.vmem %s5, %s402
        %p405 = scmp.eq.s32.totalorder %s27, 0
        // Predicated region
        $region49: #{tpu_custom_call.1} parent=39 // pred_check
          %p406 = pneg %p405
        $region50: #{tpu_custom_call.1} parent=39 // pred_check_branch
          %408 = sbr.rel (%p406) target = $region52
        $region51: #{tpu_custom_call.1} parent=39 // pred_region
          %vm409 = vcmask 7168
          %410 = vst.msk [vmem:[#allocation2] sm:$0xff] %vm409, -inf
          %411 = vst.msk [vmem:[#allocation2 + $0x8] sm:$0xff] %vm409, -inf
          %412 = vst.msk [vmem:[#allocation2 + $0x10] sm:$0xff] %vm409, -inf
          %413 = vst.msk [vmem:[#allocation2 + $0x18] sm:$0xff] %vm409, -inf
          %414 = vst.msk [vmem:[#allocation2 + $0x20] sm:$0xff] %vm409, -inf
          %415 = vst.msk [vmem:[#allocation2 + $0x28] sm:$0xff] %vm409, -inf
          %416 = vst.msk [vmem:[#allocation2 + $0x30] sm:$0xff] %vm409, -inf
          %417 = vst.msk [vmem:[#allocation2 + $0x38] sm:$0xff] %vm409, -inf
          %418 = vst.msk [vmem:[#allocation3] sm:$0xff] %vm409, 0.0
          %419 = vst.msk [vmem:[#allocation3 + $0x8] sm:$0xff] %vm409, 0.0
          %420 = vst.msk [vmem:[#allocation3 + $0x10] sm:$0xff] %vm409, 0.0
          %421 = vst.msk [vmem:[#allocation3 + $0x18] sm:$0xff] %vm409, 0.0
          %422 = vst.msk [vmem:[#allocation3 + $0x20] sm:$0xff] %vm409, 0.0
          %423 = vst.msk [vmem:[#allocation3 + $0x28] sm:$0xff] %vm409, 0.0
          %424 = vst.msk [vmem:[#allocation3 + $0x30] sm:$0xff] %vm409, 0.0
          %425 = vst.msk [vmem:[#allocation3 + $0x38] sm:$0xff] %vm409, 0.0
          %vm426 = vcmask 261120
          %427 = vst.msk [vmem:[#allocation4] sm:$0xff] %vm426, 0.0
          %428 = vst.msk [vmem:[#allocation4 + $0x8] sm:$0xff] %vm426, 0.0
          %429 = vst.msk [vmem:[#allocation4 + $0x10] sm:$0xff] %vm426, 0.0
          %430 = vst.msk [vmem:[#allocation4 + $0x18] sm:$0xff] %vm426, 0.0
          %431 = vst.msk [vmem:[#allocation4 + $0x20] sm:$0xff] %vm426, 0.0
          %432 = vst.msk [vmem:[#allocation4 + $0x28] sm:$0xff] %vm426, 0.0
          %433 = vst.msk [vmem:[#allocation4 + $0x30] sm:$0xff] %vm426, 0.0
          %434 = vst.msk [vmem:[#allocation4 + $0x38] sm:$0xff] %vm426, 0.0
        $region52: #{tpu_custom_call.1} parent=39 // pred_fallthru
          _
        %v435 = vld [vmem:[%s373] sm:$0xf]
        %v436 = vld [vmem:[%s373 + $0x4] sm:$0xf]
        %v437 = vld [vmem:[%s373 + $0x8] sm:$0xf]
        %v438 = vld [vmem:[%s373 + $0xc] sm:$0xf]
        %v439 = vld [vmem:[%s373 + $0x10] sm:$0xf]
        %v440 = vld [vmem:[%s373 + $0x14] sm:$0xf]
        %v441 = vld [vmem:[%s373 + $0x18] sm:$0xf]
        %v442 = vld [vmem:[%s373 + $0x1c] sm:$0xf]
        %v443 = vld [vmem:[%s383] sm:$0xf]
        %v444 = vld [vmem:[%s383 + $0x4] sm:$0xf]
        %v445 = vld [vmem:[%s383 + $0x8] sm:$0xf]
        %v446 = vld [vmem:[%s383 + $0xc] sm:$0xf]
        %v447 = vld [vmem:[%s383 + $0x10] sm:$0xf]
        %v448 = vld [vmem:[%s383 + $0x14] sm:$0xf]
        %v449 = vld [vmem:[%s383 + $0x18] sm:$0xf]
        %v450 = vld [vmem:[%s383 + $0x1c] sm:$0xf]
        %v451 = vld [vmem:[%s302] sm:$0xf]
        %v452 = vld [vmem:[%s302 + $0x4] sm:$0xf]
        %v453 = vld [vmem:[%s302 + $0x8] sm:$0xf]
        %v454 = vld [vmem:[%s302 + $0xc] sm:$0xf]
        %v455 = vld [vmem:[%s302 + $0x10] sm:$0xf]
        %v456 = vld [vmem:[%s302 + $0x14] sm:$0xf]
        %v457 = vld [vmem:[%s302 + $0x18] sm:$0xf]
        %v458 = vld [vmem:[%s302 + $0x1c] sm:$0xf]
        %v461 = vunpack.c.l.b16 %v435
        %v462 = vunpack.c.l.b16 %v436
        %v463 = vpack.c.b16 %v462, %v461
        %v466 = vunpack.c.l.b16 %v443
        %v467 = vunpack.c.l.b16 %v444
        %v468 = vpack.c.b16 %v467, %v466
        %vm469 = vcmask 261120
        %v471 = vsel %vm469, %v463, 0
        %v474 = vsel %vm469, %v468, 0
        %476 = vmatpush.bf16.xpose.msra.mxu0 0
        %477 = vmatpush.bf16.xpose.msra.mxu0 0
        %478 = vmatpush.bf16.xpose.msra.mxu0 0
        %479 = vmatpush.bf16.xpose.msra.mxu0 0
        %480 = vmatpush.bf16.xpose.msra.mxu0 0
        %481 = vmatpush.bf16.xpose.msra.mxu0 0
        %482 = vmatpush.bf16.xpose.msra.mxu0 0
        %483 = vmatpush.bf16.xpose.msra.mxu0 %v474
        %484 = vmatmul.bf16.gmra.mxu0 %v471
        %v485 = vpop.f32.mrf.mxu0
        %v486 = vadd.f32 0.0, %v485
        %v487 = vpop.f32.mrf.mxu0
        %v488 = vadd.f32 0.0, %v487
        %489 = vdwg.mxu0
        %v492 = vunpack.c.l.b16 %v437
        %v493 = vunpack.c.l.b16 %v438
        %v494 = vpack.c.b16 %v493, %v492
        %v497 = vunpack.c.l.b16 %v445
        %v498 = vunpack.c.l.b16 %v446
        %v499 = vpack.c.b16 %v498, %v497
        %v501 = vsel %vm469, %v494, 0
        %v504 = vsel %vm469, %v499, 0
        %506 = vmatpush.bf16.xpose.msra.mxu0 0
        %507 = vmatpush.bf16.xpose.msra.mxu0 0
        %508 = vmatpush.bf16.xpose.msra.mxu0 0
        %509 = vmatpush.bf16.xpose.msra.mxu0 0
        %510 = vmatpush.bf16.xpose.msra.mxu0 0
        %511 = vmatpush.bf16.xpose.msra.mxu0 0
        %512 = vmatpush.bf16.xpose.msra.mxu0 0
        %513 = vmatpush.bf16.xpose.msra.mxu0 %v504
        %514 = vmatmul.bf16.gmra.mxu0 %v501
        %v515 = vpop.f32.mrf.mxu0
        %v516 = vadd.f32 0.0, %v515
        %v517 = vpop.f32.mrf.mxu0
        %v518 = vadd.f32 0.0, %v517
        %519 = vdwg.mxu0
        %v522 = vunpack.c.l.b16 %v439
        %v523 = vunpack.c.l.b16 %v440
        %v524 = vpack.c.b16 %v523, %v522
        %v527 = vunpack.c.l.b16 %v447
        %v528 = vunpack.c.l.b16 %v448
        %v529 = vpack.c.b16 %v528, %v527
        %v531 = vsel %vm469, %v524, 0
        %v534 = vsel %vm469, %v529, 0
        %536 = vmatpush.bf16.xpose.msra.mxu0 0
        %537 = vmatpush.bf16.xpose.msra.mxu0 0
        %538 = vmatpush.bf16.xpose.msra.mxu0 0
        %539 = vmatpush.bf16.xpose.msra.mxu0 0
        %540 = vmatpush.bf16.xpose.msra.mxu0 0
        %541 = vmatpush.bf16.xpose.msra.mxu0 0
        %542 = vmatpush.bf16.xpose.msra.mxu0 0
        %543 = vmatpush.bf16.xpose.msra.mxu0 %v534
        %544 = vmatmul.bf16.gmra.mxu0 %v531
        %v545 = vpop.f32.mrf.mxu0
        %v546 = vadd.f32 0.0, %v545
        %v547 = vpop.f32.mrf.mxu0
        %v548 = vadd.f32 0.0, %v547
        %549 = vdwg.mxu0
        %v552 = vunpack.c.l.b16 %v441
        %v553 = vunpack.c.l.b16 %v442
        %v554 = vpack.c.b16 %v553, %v552
        %v557 = vunpack.c.l.b16 %v449
        %v558 = vunpack.c.l.b16 %v450
        %v559 = vpack.c.b16 %v558, %v557
        %v561 = vsel %vm469, %v554, 0
        %v564 = vsel %vm469, %v559, 0
        %566 = vmatpush.bf16.xpose.msra.mxu0 0
        %567 = vmatpush.bf16.xpose.msra.mxu0 0
        %568 = vmatpush.bf16.xpose.msra.mxu0 0
        %569 = vmatpush.bf16.xpose.msra.mxu0 0
        %570 = vmatpush.bf16.xpose.msra.mxu0 0
        %571 = vmatpush.bf16.xpose.msra.mxu0 0
        %572 = vmatpush.bf16.xpose.msra.mxu0 0
        %573 = vmatpush.bf16.xpose.msra.mxu0 %v564
        %574 = vmatmul.bf16.gmra.mxu0 %v561
        %v575 = vpop.f32.mrf.mxu0
        %v576 = vadd.f32 0.0, %v575
        %v577 = vpop.f32.mrf.mxu0
        %v578 = vadd.f32 0.0, %v577
        %579 = vdwg.mxu0
        %v580 = vld [vmem:[#allocation2] sm:$0xff]
        %v581 = vld [vmem:[#allocation2 + $0x8] sm:$0xff]
        %v582 = vld [vmem:[#allocation2 + $0x10] sm:$0xff]
        %v583 = vld [vmem:[#allocation2 + $0x18] sm:$0xff]
        %v584 = vld [vmem:[#allocation2 + $0x20] sm:$0xff]
        %v585 = vld [vmem:[#allocation2 + $0x28] sm:$0xff]
        %v586 = vld [vmem:[#allocation2 + $0x30] sm:$0xff]
        %v587 = vld [vmem:[#allocation2 + $0x38] sm:$0xff]
        %vm588 = vcmask 130048
        %v589 = vsel %vm588, %v486, -inf
        %590 = vmax.xlane.f32.xlu0 %v589
        %v591 = vpop.xlane.xlu0 %590
        %v592 = vsel %vm588, %v488, -inf
        %593 = vmax.xlane.f32.xlu0 %v592
        %v594 = vpop.xlane.xlu0 %593
        %v595 = vsel %vm588, %v516, -inf
        %596 = vmax.xlane.f32.xlu0 %v595
        %v597 = vpop.xlane.xlu0 %596
        %v598 = vsel %vm588, %v518, -inf
        %599 = vmax.xlane.f32.xlu0 %v598
        %v600 = vpop.xlane.xlu0 %599
        %v601 = vsel %vm588, %v546, -inf
        %602 = vmax.xlane.f32.xlu0 %v601
        %v603 = vpop.xlane.xlu0 %602
        %v604 = vsel %vm588, %v548, -inf
        %605 = vmax.xlane.f32.xlu0 %v604
        %v606 = vpop.xlane.xlu0 %605
        %v607 = vsel %vm588, %v576, -inf
        %608 = vmax.xlane.f32.xlu0 %v607
        %v609 = vpop.xlane.xlu0 %608
        %v610 = vsel %vm588, %v578, -inf
        %611 = vmax.xlane.f32.xlu0 %v610
        %v612 = vpop.xlane.xlu0 %611
        %v613 = vmax.f32 %v580, %v591
        %v614 = vmax.f32 %v581, %v594
        %v615 = vmax.f32 %v582, %v597
        %v616 = vmax.f32 %v583, %v600
        %v617 = vmax.f32 %v584, %v603
        %v618 = vmax.f32 %v585, %v606
        %v619 = vmax.f32 %v586, %v609
        %v620 = vmax.f32 %v587, %v612
        %v621 = vsub.f32 %v580, %v613
        %v622 = vsub.f32 %v581, %v614
        %v623 = vsub.f32 %v582, %v615
        %v624 = vsub.f32 %v583, %v616
        %v625 = vsub.f32 %v584, %v617
        %v626 = vsub.f32 %v585, %v618
        %v627 = vsub.f32 %v586, %v619
        %v628 = vsub.f32 %v587, %v620
        %v629 = vmul.f32 %v621, 1.442695
        %v630 = vpow.pop %v629
        %v631 = vmul.f32 %v622, 1.442695
        %v632 = vpow.pop %v631
        %v633 = vmul.f32 %v623, 1.442695
        %v634 = vpow.pop %v633
        %v635 = vmul.f32 %v624, 1.442695
        %v636 = vpow.pop %v635
        %v637 = vmul.f32 %v625, 1.442695
        %v638 = vpow.pop %v637
        %v639 = vmul.f32 %v626, 1.442695
        %v640 = vpow.pop %v639
        %v641 = vmul.f32 %v627, 1.442695
        %v642 = vpow.pop %v641
        %v643 = vmul.f32 %v628, 1.442695
        %v644 = vpow.pop %v643
        %646 = vset.pattern.permute.xlu0 0
        %647 = vperm.xlu0 %646, %v613
        %v648 = vpop.permute.xlu0 %647
        %651 = vset.pattern.permute.xlu0 0
        %652 = vperm.xlu0 %651, %v614
        %v653 = vpop.permute.xlu0 %652
        %656 = vset.pattern.permute.xlu0 0
        %657 = vperm.xlu0 %656, %v615
        %v658 = vpop.permute.xlu0 %657
        %661 = vset.pattern.permute.xlu0 0
        %662 = vperm.xlu0 %661, %v616
        %v663 = vpop.permute.xlu0 %662
        %666 = vset.pattern.permute.xlu0 0
        %667 = vperm.xlu0 %666, %v617
        %v668 = vpop.permute.xlu0 %667
        %671 = vset.pattern.permute.xlu0 0
        %672 = vperm.xlu0 %671, %v618
        %v673 = vpop.permute.xlu0 %672
        %676 = vset.pattern.permute.xlu0 0
        %677 = vperm.xlu0 %676, %v619
        %v678 = vpop.permute.xlu0 %677
        %681 = vset.pattern.permute.xlu0 0
        %682 = vperm.xlu0 %681, %v620
        %v683 = vpop.permute.xlu0 %682
        %v685 = vsub.f32 %v486, %v648
        %v686 = vsub.f32 %v488, %v653
        %v687 = vsub.f32 %v516, %v658
        %v688 = vsub.f32 %v518, %v663
        %v689 = vsub.f32 %v546, %v668
        %v690 = vsub.f32 %v548, %v673
        %v691 = vsub.f32 %v576, %v678
        %v692 = vsub.f32 %v578, %v683
        %v693 = vmul.f32 %v685, 1.442695
        %v694 = vpow.pop %v693
        %v695 = vmul.f32 %v686, 1.442695
        %v696 = vpow.pop %v695
        %v697 = vmul.f32 %v687, 1.442695
        %v698 = vpow.pop %v697
        %v699 = vmul.f32 %v688, 1.442695
        %v700 = vpow.pop %v699
        %v701 = vmul.f32 %v689, 1.442695
        %v702 = vpow.pop %v701
        %v703 = vmul.f32 %v690, 1.442695
        %v704 = vpow.pop %v703
        %v705 = vmul.f32 %v691, 1.442695
        %v706 = vpow.pop %v705
        %v707 = vmul.f32 %v692, 1.442695
        %v708 = vpow.pop %v707
        %v709 = vld [vmem:[#allocation3] sm:$0xff]
        %v710 = vld [vmem:[#allocation3 + $0x8] sm:$0xff]
        %v711 = vld [vmem:[#allocation3 + $0x10] sm:$0xff]
        %v712 = vld [vmem:[#allocation3 + $0x18] sm:$0xff]
        %v713 = vld [vmem:[#allocation3 + $0x20] sm:$0xff]
        %v714 = vld [vmem:[#allocation3 + $0x28] sm:$0xff]
        %v715 = vld [vmem:[#allocation3 + $0x30] sm:$0xff]
        %v716 = vld [vmem:[#allocation3 + $0x38] sm:$0xff]
        %v717 = vmul.f32 %v630, %v709
        %v718 = vmul.f32 %v632, %v710
        %v719 = vmul.f32 %v634, %v711
        %v720 = vmul.f32 %v636, %v712
        %v721 = vmul.f32 %v638, %v713
        %v722 = vmul.f32 %v640, %v714
        %v723 = vmul.f32 %v642, %v715
        %v724 = vmul.f32 %v644, %v716
        %v725 = vsel %vm588, %v694, 0.0
        %726 = vadd.xlane.f32.xlu0 %v725
        %v727 = vpop.xlane.xlu0 %726
        %v728 = vsel %vm588, %v696, 0.0
        %729 = vadd.xlane.f32.xlu0 %v728
        %v730 = vpop.xlane.xlu0 %729
        %v731 = vsel %vm588, %v698, 0.0
        %732 = vadd.xlane.f32.xlu0 %v731
        %v733 = vpop.xlane.xlu0 %732
        %v734 = vsel %vm588, %v700, 0.0
        %735 = vadd.xlane.f32.xlu0 %v734
        %v736 = vpop.xlane.xlu0 %735
        %v737 = vsel %vm588, %v702, 0.0
        %738 = vadd.xlane.f32.xlu0 %v737
        %v739 = vpop.xlane.xlu0 %738
        %v740 = vsel %vm588, %v704, 0.0
        %741 = vadd.xlane.f32.xlu0 %v740
        %v742 = vpop.xlane.xlu0 %741
        %v743 = vsel %vm588, %v706, 0.0
        %744 = vadd.xlane.f32.xlu0 %v743
        %v745 = vpop.xlane.xlu0 %744
        %v746 = vsel %vm588, %v708, 0.0
        %747 = vadd.xlane.f32.xlu0 %v746
        %v748 = vpop.xlane.xlu0 %747
        %v749 = vadd.f32 %v717, %v727
        %v750 = vadd.f32 %v718, %v730
        %v751 = vadd.f32 %v719, %v733
        %v752 = vadd.f32 %v720, %v736
        %v753 = vadd.f32 %v721, %v739
        %v754 = vadd.f32 %v722, %v742
        %v755 = vadd.f32 %v723, %v745
        %v756 = vadd.f32 %v724, %v748
        %vm757 = vcmask 7168
        %758 = vst.msk [vmem:[#allocation3] sm:$0xff] %vm757, %v749
        %759 = vst.msk [vmem:[#allocation3 + $0x8] sm:$0xff] %vm757, %v750
        %760 = vst.msk [vmem:[#allocation3 + $0x10] sm:$0xff] %vm757, %v751
        %761 = vst.msk [vmem:[#allocation3 + $0x18] sm:$0xff] %vm757, %v752
        %762 = vst.msk [vmem:[#allocation3 + $0x20] sm:$0xff] %vm757, %v753
        %763 = vst.msk [vmem:[#allocation3 + $0x28] sm:$0xff] %vm757, %v754
        %764 = vst.msk [vmem:[#allocation3 + $0x30] sm:$0xff] %vm757, %v755
        %765 = vst.msk [vmem:[#allocation3 + $0x38] sm:$0xff] %vm757, %v756
        %v766 = vld [vmem:[#allocation4] sm:$0xff]
        %v767 = vld [vmem:[#allocation4 + $0x8] sm:$0xff]
        %v768 = vld [vmem:[#allocation4 + $0x10] sm:$0xff]
        %v769 = vld [vmem:[#allocation4 + $0x18] sm:$0xff]
        %v770 = vld [vmem:[#allocation4 + $0x20] sm:$0xff]
        %v771 = vld [vmem:[#allocation4 + $0x28] sm:$0xff]
        %v772 = vld [vmem:[#allocation4 + $0x30] sm:$0xff]
        %v773 = vld [vmem:[#allocation4 + $0x38] sm:$0xff]
        %775 = vset.pattern.permute.xlu0 0
        %776 = vperm.xlu0 %775, %v630
        %v777 = vpop.permute.xlu0 %776
        %780 = vset.pattern.permute.xlu0 0
        %781 = vperm.xlu0 %780, %v632
        %v782 = vpop.permute.xlu0 %781
        %785 = vset.pattern.permute.xlu0 0
        %786 = vperm.xlu0 %785, %v634
        %v787 = vpop.permute.xlu0 %786
        %790 = vset.pattern.permute.xlu0 0
        %791 = vperm.xlu0 %790, %v636
        %v792 = vpop.permute.xlu0 %791
        %795 = vset.pattern.permute.xlu0 0
        %796 = vperm.xlu0 %795, %v638
        %v797 = vpop.permute.xlu0 %796
        %800 = vset.pattern.permute.xlu0 0
        %801 = vperm.xlu0 %800, %v640
        %v802 = vpop.permute.xlu0 %801
        %805 = vset.pattern.permute.xlu0 0
        %806 = vperm.xlu0 %805, %v642
        %v807 = vpop.permute.xlu0 %806
        %810 = vset.pattern.permute.xlu0 0
        %811 = vperm.xlu0 %810, %v644
        %v812 = vpop.permute.xlu0 %811
        %v814 = vmul.f32 %v777, %v766
        %v815 = vmul.f32 %v782, %v767
        %v816 = vmul.f32 %v787, %v768
        %v817 = vmul.f32 %v792, %v769
        %v818 = vmul.f32 %v797, %v770
        %v819 = vmul.f32 %v802, %v771
        %v820 = vmul.f32 %v807, %v772
        %v821 = vmul.f32 %v812, %v773
        %v822 = vpack.c.bf16 %v694, %v694
        %v823 = vpack.c.bf16 %v696, %v696
        %v824 = vpack.c.bf16 %v698, %v698
        %v825 = vpack.c.bf16 %v700, %v700
        %v826 = vpack.c.bf16 %v702, %v702
        %v827 = vpack.c.bf16 %v704, %v704
        %v828 = vpack.c.bf16 %v706, %v706
        %v829 = vpack.c.bf16 %v708, %v708
        %v832 = vunpack.c.l.b16 %v822
        %v833 = vunpack.c.l.b16 %v823
        %v834 = vpack.c.b16 %v833, %v832
        %v837 = vunpack.c.l.b16 %v451
        %v838 = vunpack.c.l.b16 %v452
        %v839 = vpack.c.b16 %v838, %v837
        %v842 = vsel %vm588, %v834, 0
        %844 = vmatpush.bf16.msra.mxu0 0
        %845 = vmatpush.bf16.msra.mxu0 0
        %846 = vmatpush.bf16.msra.mxu0 0
        %847 = vmatpush.bf16.msra.mxu0 0
        %848 = vmatpush.bf16.msra.mxu0 0
        %849 = vmatpush.bf16.msra.mxu0 0
        %850 = vmatpush.bf16.msra.mxu0 0
        %851 = vmatpush.bf16.msra.mxu0 %v839
        %852 = vmatmul.bf16.gmra.mxu0 %v842
        %v853 = vpop.f32.mrf.mxu0
        %v854 = vadd.f32 0.0, %v853
        %v855 = vpop.f32.mrf.mxu0
        %v856 = vadd.f32 0.0, %v855
        %857 = vdwg.mxu0
        %v860 = vunpack.c.l.b16 %v824
        %v861 = vunpack.c.l.b16 %v825
        %v862 = vpack.c.b16 %v861, %v860
        %v865 = vunpack.c.l.b16 %v453
        %v866 = vunpack.c.l.b16 %v454
        %v867 = vpack.c.b16 %v866, %v865
        %v870 = vsel %vm588, %v862, 0
        %872 = vmatpush.bf16.msra.mxu0 0
        %873 = vmatpush.bf16.msra.mxu0 0
        %874 = vmatpush.bf16.msra.mxu0 0
        %875 = vmatpush.bf16.msra.mxu0 0
        %876 = vmatpush.bf16.msra.mxu0 0
        %877 = vmatpush.bf16.msra.mxu0 0
        %878 = vmatpush.bf16.msra.mxu0 0
        %879 = vmatpush.bf16.msra.mxu0 %v867
        %880 = vmatmul.bf16.gmra.mxu0 %v870
        %v881 = vpop.f32.mrf.mxu0
        %v882 = vadd.f32 0.0, %v881
        %v883 = vpop.f32.mrf.mxu0
        %v884 = vadd.f32 0.0, %v883
        %885 = vdwg.mxu0
        %v888 = vunpack.c.l.b16 %v826
        %v889 = vunpack.c.l.b16 %v827
        %v890 = vpack.c.b16 %v889, %v888
        %v893 = vunpack.c.l.b16 %v455
        %v894 = vunpack.c.l.b16 %v456
        %v895 = vpack.c.b16 %v894, %v893
        %v898 = vsel %vm588, %v890, 0
        %900 = vmatpush.bf16.msra.mxu0 0
        %901 = vmatpush.bf16.msra.mxu0 0
        %902 = vmatpush.bf16.msra.mxu0 0
        %903 = vmatpush.bf16.msra.mxu0 0
        %904 = vmatpush.bf16.msra.mxu0 0
        %905 = vmatpush.bf16.msra.mxu0 0
        %906 = vmatpush.bf16.msra.mxu0 0
        %907 = vmatpush.bf16.msra.mxu0 %v895
        %908 = vmatmul.bf16.gmra.mxu0 %v898
        %v909 = vpop.f32.mrf.mxu0
        %v910 = vadd.f32 0.0, %v909
        %v911 = vpop.f32.mrf.mxu0
        %v912 = vadd.f32 0.0, %v911
        %913 = vdwg.mxu0
        %v916 = vunpack.c.l.b16 %v828
        %v917 = vunpack.c.l.b16 %v829
        %v918 = vpack.c.b16 %v917, %v916
        %v921 = vunpack.c.l.b16 %v457
        %v922 = vunpack.c.l.b16 %v458
        %v923 = vpack.c.b16 %v922, %v921
        %v926 = vsel %vm588, %v918, 0
        %928 = vmatpush.bf16.msra.mxu0 0
        %929 = vmatpush.bf16.msra.mxu0 0
        %930 = vmatpush.bf16.msra.mxu0 0
        %931 = vmatpush.bf16.msra.mxu0 0
        %932 = vmatpush.bf16.msra.mxu0 0
        %933 = vmatpush.bf16.msra.mxu0 0
        %934 = vmatpush.bf16.msra.mxu0 0
        %935 = vmatpush.bf16.msra.mxu0 %v923
        %936 = vmatmul.bf16.gmra.mxu0 %v926
        %v937 = vpop.f32.mrf.mxu0
        %v938 = vadd.f32 0.0, %v937
        %v939 = vpop.f32.mrf.mxu0
        %v940 = vadd.f32 0.0, %v939
        %941 = vdwg.mxu0
        %v942 = vadd.f32 %v814, %v854
        %v943 = vadd.f32 %v815, %v856
        %v944 = vadd.f32 %v816, %v882
        %v945 = vadd.f32 %v817, %v884
        %v946 = vadd.f32 %v818, %v910
        %v947 = vadd.f32 %v819, %v912
        %v948 = vadd.f32 %v820, %v938
        %v949 = vadd.f32 %v821, %v940
        %950 = vst.msk [vmem:[#allocation4] sm:$0xff] %vm469, %v942
        %951 = vst.msk [vmem:[#allocation4 + $0x8] sm:$0xff] %vm469, %v943
        %952 = vst.msk [vmem:[#allocation4 + $0x10] sm:$0xff] %vm469, %v944
        %953 = vst.msk [vmem:[#allocation4 + $0x18] sm:$0xff] %vm469, %v945
        %954 = vst.msk [vmem:[#allocation4 + $0x20] sm:$0xff] %vm469, %v946
        %955 = vst.msk [vmem:[#allocation4 + $0x28] sm:$0xff] %vm469, %v947
        %956 = vst.msk [vmem:[#allocation4 + $0x30] sm:$0xff] %vm469, %v948
        %957 = vst.msk [vmem:[#allocation4 + $0x38] sm:$0xff] %vm469, %v949
        %958 = vst.msk [vmem:[#allocation2] sm:$0xff] %vm757, %v613
        %959 = vst.msk [vmem:[#allocation2 + $0x8] sm:$0xff] %vm757, %v614
        %960 = vst.msk [vmem:[#allocation2 + $0x10] sm:$0xff] %vm757, %v615
        %961 = vst.msk [vmem:[#allocation2 + $0x18] sm:$0xff] %vm757, %v616
        %962 = vst.msk [vmem:[#allocation2 + $0x20] sm:$0xff] %vm757, %v617
        %963 = vst.msk [vmem:[#allocation2 + $0x28] sm:$0xff] %vm757, %v618
        %964 = vst.msk [vmem:[#allocation2 + $0x30] sm:$0xff] %vm757, %v619
        %965 = vst.msk [vmem:[#allocation2 + $0x38] sm:$0xff] %vm757, %v620
        // Predicated region
        $region53: #{tpu_custom_call.1} parent=39 // pred_check
          %p966 = pneg %p405
        $region54: #{tpu_custom_call.1} parent=39 // pred_check_branch
          %968 = sbr.rel (%p966) target = $region56
        $region55: #{tpu_custom_call.1} parent=39 // pred_region
          %v969 = vld [vmem:[#allocation3] sm:$0xff]
          %v970 = vld [vmem:[#allocation3 + $0x8] sm:$0xff]
          %v971 = vld [vmem:[#allocation3 + $0x10] sm:$0xff]
          %v972 = vld [vmem:[#allocation3 + $0x18] sm:$0xff]
          %v973 = vld [vmem:[#allocation3 + $0x20] sm:$0xff]
          %v974 = vld [vmem:[#allocation3 + $0x28] sm:$0xff]
          %v975 = vld [vmem:[#allocation3 + $0x30] sm:$0xff]
          %v976 = vld [vmem:[#allocation3 + $0x38] sm:$0xff]
          %v977 = vrcp.pop %v969
          %v978 = vrcp.pop %v970
          %v979 = vrcp.pop %v971
          %v980 = vrcp.pop %v972
          %v981 = vrcp.pop %v973
          %v982 = vrcp.pop %v974
          %v983 = vrcp.pop %v975
          %v984 = vrcp.pop %v976
          %v985 = vld [vmem:[%s394] sm:$0xff]
          %v986 = vld [vmem:[%s394 + $0x8] sm:$0xff]
          %v987 = vld [vmem:[%s394 + $0x10] sm:$0xff]
          %v988 = vld [vmem:[%s394 + $0x18] sm:$0xff]
          %v989 = vld [vmem:[%s394 + $0x20] sm:$0xff]
          %v990 = vld [vmem:[%s394 + $0x28] sm:$0xff]
          %v991 = vld [vmem:[%s394 + $0x30] sm:$0xff]
          %v992 = vld [vmem:[%s394 + $0x38] sm:$0xff]
          %v993 = vmul.f32 %v985, %v977
          %v994 = vmul.f32 %v986, %v978
          %v995 = vmul.f32 %v987, %v979
          %v996 = vmul.f32 %v988, %v980
          %v997 = vmul.f32 %v989, %v981
          %v998 = vmul.f32 %v990, %v982
          %v999 = vmul.f32 %v991, %v983
          %v1000 = vmul.f32 %v992, %v984
          %v1001 = vld [vmem:[#allocation4] sm:$0xff]
          %v1002 = vld [vmem:[#allocation4 + $0x8] sm:$0xff]
          %v1003 = vld [vmem:[#allocation4 + $0x10] sm:$0xff]
          %v1004 = vld [vmem:[#allocation4 + $0x18] sm:$0xff]
          %v1005 = vld [vmem:[#allocation4 + $0x20] sm:$0xff]
          %v1006 = vld [vmem:[#allocation4 + $0x28] sm:$0xff]
          %v1007 = vld [vmem:[#allocation4 + $0x30] sm:$0xff]
          %v1008 = vld [vmem:[#allocation4 + $0x38] sm:$0xff]
          %1010 = vset.pattern.permute.xlu0 0
          %1011 = vperm.xlu0 %1010, %v993
          %v1012 = vpop.permute.xlu0 %1011
          %1015 = vset.pattern.permute.xlu0 0
          %1016 = vperm.xlu0 %1015, %v994
          %v1017 = vpop.permute.xlu0 %1016
          %1020 = vset.pattern.permute.xlu0 0
          %1021 = vperm.xlu0 %1020, %v995
          %v1022 = vpop.permute.xlu0 %1021
          %1025 = vset.pattern.permute.xlu0 0
          %1026 = vperm.xlu0 %1025, %v996
          %v1027 = vpop.permute.xlu0 %1026
          %1030 = vset.pattern.permute.xlu0 0
          %1031 = vperm.xlu0 %1030, %v997
          %v1032 = vpop.permute.xlu0 %1031
          %1035 = vset.pattern.permute.xlu0 0
          %1036 = vperm.xlu0 %1035, %v998
          %v1037 = vpop.permute.xlu0 %1036
          %1040 = vset.pattern.permute.xlu0 0
          %1041 = vperm.xlu0 %1040, %v999
          %v1042 = vpop.permute.xlu0 %1041
          %1045 = vset.pattern.permute.xlu0 0
          %1046 = vperm.xlu0 %1045, %v1000
          %v1047 = vpop.permute.xlu0 %1046
          %v1049 = vmul.f32 %v1001, %v1012
          %v1050 = vmul.f32 %v1002, %v1017
          %v1051 = vmul.f32 %v1003, %v1022
          %v1052 = vmul.f32 %v1004, %v1027
          %v1053 = vmul.f32 %v1005, %v1032
          %v1054 = vmul.f32 %v1006, %v1037
          %v1055 = vmul.f32 %v1007, %v1042
          %v1056 = vmul.f32 %v1008, %v1047
          %v1057 = vpack.c.bf16 %v1049, %v1049
          %v1058 = vpack.c.bf16 %v1050, %v1050
          %v1059 = vpack.c.bf16 %v1051, %v1051
          %v1060 = vpack.c.bf16 %v1052, %v1052
          %v1061 = vpack.c.bf16 %v1053, %v1053
          %v1062 = vpack.c.bf16 %v1054, %v1054
          %v1063 = vpack.c.bf16 %v1055, %v1055
          %v1064 = vpack.c.bf16 %v1056, %v1056
          %v1065 = vld [vmem:[#allocation7] sm:$0xf]
          %v1066 = vld [vmem:[#allocation7 + $0x4] sm:$0xf]
          %v1067 = vld [vmem:[#allocation7 + $0x8] sm:$0xf]
          %v1068 = vld [vmem:[#allocation7 + $0xc] sm:$0xf]
          %v1069 = vld [vmem:[#allocation7 + $0x10] sm:$0xf]
          %v1070 = vld [vmem:[#allocation7 + $0x14] sm:$0xf]
          %v1071 = vld [vmem:[#allocation7 + $0x18] sm:$0xf]
          %v1072 = vld [vmem:[#allocation7 + $0x1c] sm:$0xf]
          %v1073 = vld [vmem:[#allocation7 + $0x20] sm:$0xf]
          %v1074 = vld [vmem:[#allocation7 + $0x24] sm:$0xf]
          %v1075 = vld [vmem:[#allocation7 + $0x28] sm:$0xf]
          %v1076 = vld [vmem:[#allocation7 + $0x2c] sm:$0xf]
          %v1077 = vld [vmem:[#allocation7 + $0x30] sm:$0xf]
          %v1078 = vld [vmem:[#allocation7 + $0x34] sm:$0xf]
          %v1079 = vld [vmem:[#allocation7 + $0x38] sm:$0xf]
          %v1080 = vld [vmem:[#allocation7 + $0x3c] sm:$0xf]
          %v1085 = vunpack.c.l.b16 %v1065
          %v1086 = vunpack.c.l.b16 %v1066
          %v1087 = vunpack.c.l.b16 %v1067
          %v1088 = vunpack.c.l.b16 %v1068
          %v1089 = vpack.c.b16 %v1086, %v1085
          %v1090 = vpack.c.b16 %v1088, %v1087
          %v1093 = vunpack.c.l.b16 %v1057
          %v1094 = vunpack.c.l.b16 %v1058
          %v1095 = vpack.c.b16 %v1094, %v1093
          %v1097 = vsel %vm469, %v1089, 0
          %v1100 = vsel %vm469, %v1090, 0
          %v1103 = vsel %vm469, %v1095, 0
          %1105 = vmatpush.bf16.xpose.msra.mxu0 0
          %1106 = vmatpush.bf16.xpose.msra.mxu0 0
          %1107 = vmatpush.bf16.xpose.msra.mxu0 0
          %1108 = vmatpush.bf16.xpose.msra.mxu0 0
          %1109 = vmatpush.bf16.xpose.msra.mxu0 0
          %1110 = vmatpush.bf16.xpose.msra.mxu0 0
          %1111 = vmatpush.bf16.xpose.msra.mxu0 0
          %1112 = vmatpush.bf16.xpose.msra.mxu0 %v1103
          %1113 = vmatmul.bf16.gmra.mxu0 %v1097
          %v1114 = vpop.f32.mrf.mxu0
          %v1115 = vadd.f32 0.0, %v1114
          %v1116 = vpop.f32.mrf.mxu0
          %v1117 = vadd.f32 0.0, %v1116
          %1118 = vmatmul.bf16.gmra.mxu0 %v1100
          %v1119 = vpop.f32.mrf.mxu0
          %v1120 = vadd.f32 0.0, %v1119
          %v1121 = vpop.f32.mrf.mxu0
          %v1122 = vadd.f32 0.0, %v1121
          %1123 = vdwg.mxu0
          %v1128 = vunpack.c.l.b16 %v1069
          %v1129 = vunpack.c.l.b16 %v1070
          %v1130 = vunpack.c.l.b16 %v1071
          %v1131 = vunpack.c.l.b16 %v1072
          %v1132 = vpack.c.b16 %v1129, %v1128
          %v1133 = vpack.c.b16 %v1131, %v1130
          %v1136 = vunpack.c.l.b16 %v1059
          %v1137 = vunpack.c.l.b16 %v1060
          %v1138 = vpack.c.b16 %v1137, %v1136
          %v1140 = vsel %vm469, %v1132, 0
          %v1143 = vsel %vm469, %v1133, 0
          %v1146 = vsel %vm469, %v1138, 0
          %1148 = vmatpush.bf16.xpose.msra.mxu0 0
          %1149 = vmatpush.bf16.xpose.msra.mxu0 0
          %1150 = vmatpush.bf16.xpose.msra.mxu0 0
          %1151 = vmatpush.bf16.xpose.msra.mxu0 0
          %1152 = vmatpush.bf16.xpose.msra.mxu0 0
          %1153 = vmatpush.bf16.xpose.msra.mxu0 0
          %1154 = vmatpush.bf16.xpose.msra.mxu0 0
          %1155 = vmatpush.bf16.xpose.msra.mxu0 %v1146
          %1156 = vmatmul.bf16.gmra.mxu0 %v1140
          %v1157 = vpop.f32.mrf.mxu0
          %v1158 = vadd.f32 0.0, %v1157
          %v1159 = vpop.f32.mrf.mxu0
          %v1160 = vadd.f32 0.0, %v1159
          %1161 = vmatmul.bf16.gmra.mxu0 %v1143
          %v1162 = vpop.f32.mrf.mxu0
          %v1163 = vadd.f32 0.0, %v1162
          %v1164 = vpop.f32.mrf.mxu0
          %v1165 = vadd.f32 0.0, %v1164
          %1166 = vdwg.mxu0
          %v1171 = vunpack.c.l.b16 %v1073
          %v1172 = vunpack.c.l.b16 %v1074
          %v1173 = vunpack.c.l.b16 %v1075
          %v1174 = vunpack.c.l.b16 %v1076
          %v1175 = vpack.c.b16 %v1172, %v1171
          %v1176 = vpack.c.b16 %v1174, %v1173
          %v1179 = vunpack.c.l.b16 %v1061
          %v1180 = vunpack.c.l.b16 %v1062
          %v1181 = vpack.c.b16 %v1180, %v1179
          %v1183 = vsel %vm469, %v1175, 0
          %v1186 = vsel %vm469, %v1176, 0
          %v1189 = vsel %vm469, %v1181, 0
          %1191 = vmatpush.bf16.xpose.msra.mxu0 0
          %1192 = vmatpush.bf16.xpose.msra.mxu0 0
          %1193 = vmatpush.bf16.xpose.msra.mxu0 0
          %1194 = vmatpush.bf16.xpose.msra.mxu0 0
          %1195 = vmatpush.bf16.xpose.msra.mxu0 0
          %1196 = vmatpush.bf16.xpose.msra.mxu0 0
          %1197 = vmatpush.bf16.xpose.msra.mxu0 0
          %1198 = vmatpush.bf16.xpose.msra.mxu0 %v1189
          %1199 = vmatmul.bf16.gmra.mxu0 %v1183
          %v1200 = vpop.f32.mrf.mxu0
          %v1201 = vadd.f32 0.0, %v1200
          %v1202 = vpop.f32.mrf.mxu0
          %v1203 = vadd.f32 0.0, %v1202
          %1204 = vmatmul.bf16.gmra.mxu0 %v1186
          %v1205 = vpop.f32.mrf.mxu0
          %v1206 = vadd.f32 0.0, %v1205
          %v1207 = vpop.f32.mrf.mxu0
          %v1208 = vadd.f32 0.0, %v1207
          %1209 = vdwg.mxu0
          %v1214 = vunpack.c.l.b16 %v1077
          %v1215 = vunpack.c.l.b16 %v1078
          %v1216 = vunpack.c.l.b16 %v1079
          %v1217 = vunpack.c.l.b16 %v1080
          %v1218 = vpack.c.b16 %v1215, %v1214
          %v1219 = vpack.c.b16 %v1217, %v1216
          %v1222 = vunpack.c.l.b16 %v1063
          %v1223 = vunpack.c.l.b16 %v1064
          %v1224 = vpack.c.b16 %v1223, %v1222
          %v1226 = vsel %vm469, %v1218, 0
          %v1229 = vsel %vm469, %v1219, 0
          %v1232 = vsel %vm469, %v1224, 0
          %1234 = vmatpush.bf16.xpose.msra.mxu0 0
          %1235 = vmatpush.bf16.xpose.msra.mxu0 0
          %1236 = vmatpush.bf16.xpose.msra.mxu0 0
          %1237 = vmatpush.bf16.xpose.msra.mxu0 0
          %1238 = vmatpush.bf16.xpose.msra.mxu0 0
          %1239 = vmatpush.bf16.xpose.msra.mxu0 0
          %1240 = vmatpush.bf16.xpose.msra.mxu0 0
          %1241 = vmatpush.bf16.xpose.msra.mxu0 %v1232
          %1242 = vmatmul.bf16.gmra.mxu0 %v1226
          %v1243 = vpop.f32.mrf.mxu0
          %v1244 = vadd.f32 0.0, %v1243
          %v1245 = vpop.f32.mrf.mxu0
          %v1246 = vadd.f32 0.0, %v1245
          %1247 = vmatmul.bf16.gmra.mxu0 %v1229
          %v1248 = vpop.f32.mrf.mxu0
          %v1249 = vadd.f32 0.0, %v1248
          %v1250 = vpop.f32.mrf.mxu0
          %v1251 = vadd.f32 0.0, %v1250
          %1252 = vdwg.mxu0
          %v1253 = vsel %vm588, %v1115, 0.0
          %v1254 = vsel %vm588, %v1158, 0.0
          %v1255 = vadd.f32 %v1253, %v1254
          %v1256 = vsel %vm588, %v1201, 0.0
          %v1257 = vadd.f32 %v1255, %v1256
          %v1258 = vsel %vm588, %v1244, 0.0
          %v1259 = vadd.f32 %v1257, %v1258
          %v1260 = vsel %vm588, %v1117, 0.0
          %v1261 = vsel %vm588, %v1160, 0.0
          %v1262 = vadd.f32 %v1260, %v1261
          %v1263 = vsel %vm588, %v1203, 0.0
          %v1264 = vadd.f32 %v1262, %v1263
          %v1265 = vsel %vm588, %v1246, 0.0
          %v1266 = vadd.f32 %v1264, %v1265
          %v1267 = vsel %vm588, %v1120, 0.0
          %v1268 = vsel %vm588, %v1163, 0.0
          %v1269 = vadd.f32 %v1267, %v1268
          %v1270 = vsel %vm588, %v1206, 0.0
          %v1271 = vadd.f32 %v1269, %v1270
          %v1272 = vsel %vm588, %v1249, 0.0
          %v1273 = vadd.f32 %v1271, %v1272
          %v1274 = vsel %vm588, %v1122, 0.0
          %v1275 = vsel %vm588, %v1165, 0.0
          %v1276 = vadd.f32 %v1274, %v1275
          %v1277 = vsel %vm588, %v1208, 0.0
          %v1278 = vadd.f32 %v1276, %v1277
          %v1279 = vsel %vm588, %v1251, 0.0
          %v1280 = vadd.f32 %v1278, %v1279
          %1281 = vst.msk [vmem:[%s403] sm:$0xff] %vm588, %v1259
          %1282 = vst.msk [vmem:[%s403 + $0x8] sm:$0xff] %vm588, %v1266
          %1283 = vst.msk [vmem:[%s403 + $0x10] sm:$0xff] %vm588, %v1273
          %1284 = vst.msk [vmem:[%s403 + $0x18] sm:$0xff] %vm588, %v1280
        $region56: #{tpu_custom_call.1} parent=39 // pred_fallthru
          _
        %p1285 = scmp.lt.s32.totalorder %s25, 1
        %s1286 = scalar_select %p1285, %s25, 1
        %p1287 = scmp.lt.s32.totalorder %s26, 0
        %s1288 = scalar_select %p1287, %s26, 0
        %s1289 = smul.addr %s1286, 4
        %s1290 = sadd.s32 %s1288, %s1289
        %s1291 = smul.addr %s1290, 8
        %s1292 = scalar_lea.vmem %s5, %s1291
        // Predicated region
        $region57: #{tpu_custom_call.1} parent=39 // pred_check
          %p1293 = pneg %p192
        $region58: #{tpu_custom_call.1} parent=39 // pred_check_branch
          %1295 = sbr.rel (%p1293) target = $region60
        $region59: #{tpu_custom_call.1} parent=39 // pred_region
          _
        $region60: #{tpu_custom_call.1} parent=39 // pred_fallthru
          _
      $region40: #{tpu_custom_call.1} parent=5 // pred_fallthru
        _
      %p1296 = scmp.le.s32.totalorder 2, %s15
      // Predicated region
      $region61: #{tpu_custom_call.1} parent=5 // pred_check
        %p1297 = pneg %p1296
      $region62: #{tpu_custom_call.1} parent=5 // pred_check_branch
        %1299 = sbr.rel (%p1297) target = $region64
      $region63: #{tpu_custom_call.1} parent=5 // pred_region
        %s1300 = ssub.s32 %s15, 2
        // Predicated region
        $region65: #{tpu_custom_call.1} parent=63 // pred_check
          %p1301 = pneg %p198
        $region66: #{tpu_custom_call.1} parent=63 // pred_check_branch
          %1303 = sbr.rel (%p1301) target = $region68
        $region67: #{tpu_custom_call.1} parent=63 // pred_region
          %p1304 = scmp.lt.s32.totalorder %s28, 1
          %s1305 = scalar_select %p1304, %s28, 1
          %p1306 = scmp.lt.s32.totalorder %s29, 0
          %s1307 = scalar_select %p1306, %s29, 0
          %s1308 = smul.addr %s1305, 4
          %s1309 = sadd.s32 %s1307, %s1308
          %s1310 = smul.addr %s1309, 8
          %s1311 = scalar_lea.vmem %s5, %s1310
        $region68: #{tpu_custom_call.1} parent=63 // pred_fallthru
          _
      $region64: #{tpu_custom_call.1} parent=5 // pred_fallthru
        _
    $region6: #{tpu_custom_call.1} parent=1 // loop_footer
      %s19 = sadd.s32 1, %s15
    $region7: #{tpu_custom_call.1} parent=1 // loop_footer_branch
      %14 = sbr.rel target = $region3
    $region8: #{tpu_custom_call.1} parent=1 // loop_exit
      _
    %1312 = vsyncpa [#allocation6], 1
    %s1313 = scalar_lea.sflag [#allocation6], 1
    %1314 = vsyncpa %s1313, 1
    %1315 = vsyncpa [#allocation8], 1

</llo_original>
